<compile_context>
chip_gen: v7x
topology: tpu7x:2x2x1
jax: 0.10.0
libtpu: 0.0.40
codegen_flags: <defaults>
</compile_context>

<pallas_src>
import jax
import jax.numpy as jnp
import numpy as np
from jax.experimental import pallas as pl
from jax.experimental.pallas import tpu as pltpu

_EPS = 1e-5


def _upsample_kernel(x_ref, ie_ref, io_ref, t_ref,
                     wl_ref, bl_ref, wup_e_ref, wup_o_ref, bup_ref,
                     w1s_ref, w1u_ref, g1_ref, be1_ref,
                     w2_ref, g2_ref, be2_ref,
                     out_ref):
    B, L, Cin = x_ref.shape          # L is the PRE-upsample length
    Cpad = ie_ref.shape[2]           # channels padded to 128/256 lanes
    BL = B * L
    f32, bf16 = jnp.float32, jnp.bfloat16

    # ---- time-embedding MLP: SiLU -> Linear (tiny, kept in f32) ----
    t = t_ref[...]
    t = t * (1.0 / (1.0 + jnp.exp(-t)))                                   # SiLU
    temb = jnp.dot(t, wl_ref[...], preferred_element_type=f32) + bl_ref[...]
    cvec = temb + bup_ref[...]               # ConvTranspose bias folded, (B, Cpad)

    # ---- ConvTranspose1d(k=2, s=2): one bf16 matmul per parity tap ----
    xb = x_ref[...].reshape(BL, Cin)                                      # bf16
    u_e = (jnp.dot(xb, wup_e_ref[...], preferred_element_type=f32)
           .reshape(B, L, Cpad) + cvec[:, None, :])                       # pos 2l
    u_o = (jnp.dot(xb, wup_o_ref[...], preferred_element_type=f32)
           .reshape(B, L, Cpad) + cvec[:, None, :])                       # pos 2l+1

    # ---- boundary masks: built once at full lane width, reused by both convs ----
    pos = jax.lax.broadcasted_iota(jnp.int32, (1, L, Cpad), 1)
    keep_first = (pos > 0).astype(f32)        # zeroes row l==0 after "prev" roll
    keep_last = (pos < L - 1).astype(f32)     # zeroes row l==L-1 after "next" roll

    def roll_prev(a):   # a[l-1], zero at l == 0       (f32 roll, then cast)
        return pltpu.roll(a, 1, axis=1) * keep_first

    def roll_next(a):   # a[l+1], zero at l == L-1
        return pltpu.roll(a, L - 1, axis=1) * keep_last

    def mm(a, w):       # (B,L,C) bf16 x (C,Cpad) bf16 -> (BL,Cpad) f32
        return jnp.dot(a.reshape(BL, a.shape[-1]), w, preferred_element_type=f32)

    def bn_scale_shift(y_e, y_o, g, be):
        # training-mode BatchNorm1d over both parity phases, folded to one FMA
        n = jnp.float32(2 * BL)
        s = jnp.sum(y_e, axis=0, keepdims=True) + jnp.sum(y_o, axis=0, keepdims=True)
        sq = (jnp.sum(y_e * y_e, axis=0, keepdims=True)
              + jnp.sum(y_o * y_o, axis=0, keepdims=True))
        mean = s / n
        var = jnp.maximum(sq / n - mean * mean, 0.0)      # cancellation guard
        scale = g * jax.lax.rsqrt(var + _EPS)
        shift = be - mean * scale
        return scale, shift

    # ---- conv1: per-tap accumulated matmuls, skip/up weight blocks split ----
    ie, io = ie_ref[...], io_ref[...]                     # f32 skip phases
    ie_b, io_b = ie.astype(bf16), io.astype(bf16)
    ien_b, iop_b = roll_next(ie).astype(bf16), roll_prev(io).astype(bf16)
    ue_b, uo_b = u_e.astype(bf16), u_o.astype(bf16)
    uen_b, uop_b = roll_next(u_e).astype(bf16), roll_prev(u_o).astype(bf16)

    y1_e = (mm(iop_b, w1s_ref[0]) + mm(uop_b, w1u_ref[0])
            + mm(ie_b, w1s_ref[1]) + mm(ue_b, w1u_ref[1])
            + mm(io_b, w1s_ref[2]) + mm(uo_b, w1u_ref[2]))               # (BL, Cpad)
    y1_o = (mm(ie_b, w1s_ref[0]) + mm(ue_b, w1u_ref[0])
            + mm(io_b, w1s_ref[1]) + mm(uo_b, w1u_ref[1])
            + mm(ien_b, w1s_ref[2]) + mm(uen_b, w1u_ref[2]))

    scale1, shift1 = bn_scale_shift(y1_e, y1_o, g1_ref[...], be1_ref[...])
    h1_e = jnp.maximum(y1_e * scale1 + shift1, 0.0).reshape(B, L, Cpad)   # f32
    h1_o = jnp.maximum(y1_o * scale1 + shift1, 0.0).reshape(B, L, Cpad)

    # ---- conv2: per-tap accumulated matmuls ----
    h1e_b, h1o_b = h1_e.astype(bf16), h1_o.astype(bf16)
    h1en_b, h1op_b = roll_next(h1_e).astype(bf16), roll_prev(h1_o).astype(bf16)

    y2_e = mm(h1op_b, w2_ref[0]) + mm(h1e_b, w2_ref[1]) + mm(h1o_b, w2_ref[2])
    y2_o = mm(h1e_b, w2_ref[0]) + mm(h1o_b, w2_ref[1]) + mm(h1en_b, w2_ref[2])

    scale2, shift2 = bn_scale_shift(y2_e, y2_o, g2_ref[...], be2_ref[...])

    # phase-packed output via two 128-aligned direct stores (no concat)
    out_ref[:, :, :Cpad] = jnp.maximum(y2_e * scale2 + shift2, 0.0).reshape(B, L, Cpad)
    out_ref[:, :, Cpad:] = jnp.maximum(y2_o * scale2 + shift2, 0.0).reshape(B, L, Cpad)


def upsample_block(x_ncl, inter_ncl, t_emb, params):
    """x: (B, C_in, L), inter: (B, C_in - C_out, 2L), t_emb: (B, T) -> (B, C_out, 2L)."""
    B, Cin, L = x_ncl.shape
    Cout = params["w1"].shape[0]
    Cskip = inter_ncl.shape[1]
    Tdim = t_emb.shape[1]
    L2 = 2 * L
    assert Cskip + Cout == params["w1"].shape[1]          # conv1 in_channels
    assert inter_ncl.shape == (B, Cskip, L2)
    assert (B * L) % 8 == 0, "B*L must be a multiple of 8 (sublane alignment)"

    f32, bf16 = jnp.float32, jnp.bfloat16
    Cmax = max(Cout, Cskip)
    lane = 256 if Cmax > 128 else 128          # 256-lane pad feeds v6e/v7x 256x256 MXU
    Cpad = ((Cmax + lane - 1) // lane) * lane

    # activations -> channels-last, de-interleaved by parity, channel-padded.
    # x is a pure MXU operand -> bf16 in HBM; inter stays f32 (rolled in-kernel).
    x_blc = jnp.transpose(x_ncl, (0, 2, 1)).astype(bf16)                  # (B, L, Cin)
    inter_blc = jnp.transpose(inter_ncl, (0, 2, 1)).astype(f32).reshape(B, L, 2, Cskip)
    pad_c = lambda a: jnp.pad(a, ((0, 0), (0, 0), (0, Cpad - a.shape[-1])))
    inter_e = pad_c(inter_blc[:, :, 0, :])                                # positions 2l
    inter_o = pad_c(inter_blc[:, :, 1, :])                                # positions 2l+1

    # ---- weights re-packed (channel-padded, bf16 for MXU) ----
    wl_pad = jnp.zeros((Tdim, Cpad), f32).at[:, :Cout].set(params["wl"].T)
    bl_pad = jnp.zeros((1, Cpad), f32).at[:, :Cout].set(params["bl"])
    wup_e = jnp.zeros((Cin, Cpad), f32).at[:, :Cout].set(params["wt"][:, :, 0]).astype(bf16)
    wup_o = jnp.zeros((Cin, Cpad), f32).at[:, :Cout].set(params["wt"][:, :, 1]).astype(bf16)
    bup_pad = jnp.zeros((1, Cpad), f32).at[:, :Cout].set(params["b_up"])

    w1_t = jnp.transpose(params["w1"], (2, 1, 0))                         # (3, Cin_tot, Cout)
    w1s = (jnp.zeros((3, Cpad, Cpad), f32)
           .at[:, :Cskip, :Cout].set(w1_t[:, :Cskip, :])).astype(bf16)    # skip block
    w1u = (jnp.zeros((3, Cpad, Cpad), f32)
           .at[:, :Cout, :Cout].set(w1_t[:, Cskip:, :])).astype(bf16)     # upsample block
    w2_t = jnp.transpose(params["w2"], (2, 1, 0))                         # (3, Cout, Cout)
    w2p = (jnp.zeros((3, Cpad, Cpad), f32)
           .at[:, :Cout, :Cout].set(w2_t)).astype(bf16)

    pad_vec = lambda v: jnp.zeros((1, Cpad), f32).at[:, :Cout].set(v)
    g1p, be1p = pad_vec(params["g1"]), pad_vec(params["be1"])
    g2p, be2p = pad_vec(params["g2"]), pad_vec(params["be2"])

    # conv biases b1/b2 intentionally dropped: removed by BN mean subtraction.
    args = (x_blc, inter_e, inter_o, t_emb.astype(f32),
            wl_pad, bl_pad, wup_e, wup_o, bup_pad,
            w1s, w1u, g1p, be1p, w2p, g2p, be2p)

    BL = B * L
    flops = 2 * (B * Tdim * Cpad                 # time-embedding MLP
                 + BL * Cin * 2 * Cpad           # conv-transpose (2 taps)
                 + 12 * BL * Cpad * Cpad         # conv1 (3 taps x 2 phases x skip/up)
                 + 6 * BL * Cpad * Cpad)         # conv2 (3 taps x 2 phases)
    in_bytes = sum(int(a.size) * a.dtype.itemsize for a in args)
    out_bytes = B * L * 2 * Cpad * 4
    bytes_accessed = in_bytes + out_bytes

    # scoped-VMEM limit sized to the actual working set (defaults: 16/32 MiB),
    # capped at v7x physical (64 MiB).
    live_bytes = 16 * BL * Cpad * 4              # generous bound on f32/bf16 temporaries
    vmem_limit = int(min(max(2 * (in_bytes + out_bytes) + live_bytes, 32 << 20), 64 << 20))

    vmem = lambda: pl.BlockSpec(memory_space=pltpu.MemorySpace.VMEM)
    out_pad = pl.pallas_call(
        _upsample_kernel,
        out_shape=jax.ShapeDtypeStruct((B, L, 2 * Cpad), f32),
        in_specs=[vmem() for _ in args],
        out_specs=vmem(),
        compiler_params=pltpu.CompilerParams(vmem_limit_bytes=vmem_limit),
        cost_estimate=pl.CostEstimate(flops=int(flops),
                                      transcendentals=int(B * Tdim + 4 * Cpad),
                                      bytes_accessed=int(bytes_accessed)),
    )(*args)

    # free row-major reshape interleaves the parity phases; one transpose back to NCL
    out = out_pad.reshape(B, L, 2, Cpad)[:, :, :, :Cout].reshape(B, L2, Cout)
    return jnp.transpose(out, (0, 2, 1))                                  # (B, Cout, 2L)


def init_params(key, in_ch, out_ch, time_dim):
    ks = jax.random.split(key, 10)
    n = lambda k, shape, s: s * jax.random.normal(k, shape, jnp.float32)
    return {
        "wl": n(ks[0], (out_ch, time_dim), 0.1),   # Linear(time_dim -> out_ch)
        "bl": n(ks[1], (out_ch,), 0.1),
        "wt": n(ks[2], (in_ch, out_ch, 2), 0.2),   # ConvTranspose1d weight (Cin, Cout, 2)
        "b_up": n(ks[3], (out_ch,), 0.1),
        "w1": n(ks[4], (out_ch, in_ch, 3), 0.2),   # Conv1d(in_ch -> out_ch, k=3, p=1)
        "b1": n(ks[5], (out_ch,), 0.1),
        "g1": 1.0 + n(ks[6], (out_ch,), 0.1),      # BN1 gamma / beta
        "be1": n(ks[7], (out_ch,), 0.1),
        "w2": n(ks[8], (out_ch, out_ch, 3), 0.2),  # Conv1d(out_ch -> out_ch, k=3, p=1)
        "b2": n(ks[9], (out_ch,), 0.1),
        "g2": jnp.ones((out_ch,), jnp.float32),
        "be2": jnp.zeros((out_ch,), jnp.float32),
    }


def _reference_forward(x, inter, t_emb, p):
    """Pure-JAX f32 reference in NCL, mirrors the PyTorch forward (train mode)."""
    B, Cin, L = x.shape
    hi = jax.lax.Precision.HIGHEST
    te = t_emb * (1.0 / (1.0 + jnp.exp(-t_emb)))                          # SiLU
    te = jnp.dot(te, p["wl"].T, precision=hi) + p["bl"]
    u_e = jnp.einsum("bil,io->bol", x, p["wt"][:, :, 0], precision=hi)
    u_o = jnp.einsum("bil,io->bol", x, p["wt"][:, :, 1], precision=hi)
    u = jnp.stack([u_e, u_o], axis=-1).reshape(B, -1, 2 * L)
    u = u + p["b_up"][None, :, None] + te[:, :, None]
    z = jnp.concatenate([inter, u], axis=1)

    def conv_bn_relu(z, w, b, g, be):
        y = jax.lax.conv_general_dilated(
            z, w, (1,), [(1, 1)], dimension_numbers=("NCH", "OIH", "NCH"),
            precision=hi) + b[None, :, None]
        mean = jnp.mean(y, axis=(0, 2), keepdims=True)
        var = jnp.mean((y - mean) ** 2, axis=(0, 2), keepdims=True)
        y = (y - mean) / jnp.sqrt(var + _EPS) * g[None, :, None] + be[None, :, None]
        return jnp.maximum(y, 0.0)

    y = conv_bn_relu(z, p["w1"], p["b1"], p["g1"], p["be1"])
    y = conv_bn_relu(y, p["w2"], p["b2"], p["g2"], p["be2"])
    return y


if __name__ == "__main__":
    B, C_IN, C_OUT, L_IN, T_DIM = 2, 8, 4, 8, 32
    C_SKIP = C_IN - C_OUT

    key = jax.random.PRNGKey(0)
    kx, ki, kt, kp = jax.random.split(key, 4)
    x = jax.random.normal(kx, (B, C_IN, L_IN), jnp.float32)               # PyTorch NCL
    inter = jax.random.normal(ki, (B, C_SKIP, 2 * L_IN), jnp.float32)     # skip tensor
    t_emb = jax.random.normal(kt, (B, T_DIM), jnp.float32)
    params = init_params(kp, C_IN, C_OUT, T_DIM)

    fwd = jax.jit(upsample_block)
    out = fwd(x, inter, t_emb, params)
    jax.block_until_ready(out)

    # kernel uses bf16 MXU operands (f32 accumulation) -> compare to the f32
    # reference with a bf16-appropriate tolerance.
    out_ref = _reference_forward(x, inter, t_emb, params)
    np.testing.assert_allclose(np.asarray(out), np.asarray(out_ref), rtol=5e-2, atol=5e-2)
    assert out.shape == (B, C_OUT, 2 * L_IN)
    print("KERNEL_OK")
</pallas_src>

<mosaic_0001>
module attributes {stable_mosaic.version = 11 : i64} {
  func.func @_upsample_kernel(%arg0: memref<2x8x8xbf16, #tpu.memory_space<vmem>>, %arg1: memref<2x8x128xf32, #tpu.memory_space<vmem>>, %arg2: memref<2x8x128xf32, #tpu.memory_space<vmem>>, %arg3: memref<2x32xf32, #tpu.memory_space<vmem>>, %arg4: memref<32x128xf32, #tpu.memory_space<vmem>>, %arg5: memref<1x128xf32, #tpu.memory_space<vmem>>, %arg6: memref<8x128xbf16, #tpu.memory_space<vmem>>, %arg7: memref<8x128xbf16, #tpu.memory_space<vmem>>, %arg8: memref<1x128xf32, #tpu.memory_space<vmem>>, %arg9: memref<3x128x128xbf16, #tpu.memory_space<vmem>>, %arg10: memref<3x128x128xbf16, #tpu.memory_space<vmem>>, %arg11: memref<1x128xf32, #tpu.memory_space<vmem>>, %arg12: memref<1x128xf32, #tpu.memory_space<vmem>>, %arg13: memref<3x128x128xbf16, #tpu.memory_space<vmem>>, %arg14: memref<1x128xf32, #tpu.memory_space<vmem>>, %arg15: memref<1x128xf32, #tpu.memory_space<vmem>>, %arg16: memref<2x8x256xf32, #tpu.memory_space<vmem>>) attributes {dimension_semantics = [], scalar_prefetch = 0 : i64, scratch_operands = 0 : i64, tpu.core_type = #tpu.core_type<tc>} {
    %c0 = arith.constant 0 : index
    %c0_0 = arith.constant 0 : index
    %0 = vector.load %arg3[%c0, %c0_0] : memref<2x32xf32, #tpu.memory_space<vmem>>, vector<2x32xf32>
    %cst = arith.constant 0.000000e+00 : f32
    %1 = vector.broadcast %cst : f32 to vector<2x32xf32>
    %2 = arith.subf %1, %0 : vector<2x32xf32>
    %3 = math.exp %2 : vector<2x32xf32>
    %cst_1 = arith.constant 1.000000e+00 : f32
    %4 = vector.broadcast %cst_1 : f32 to vector<2x32xf32>
    %5 = arith.addf %4, %3 : vector<2x32xf32>
    %cst_2 = arith.constant 1.000000e+00 : f32
    %6 = vector.broadcast %cst_2 : f32 to vector<2x32xf32>
    %7 = arith.divf %6, %5 : vector<2x32xf32>
    %8 = arith.mulf %0, %7 : vector<2x32xf32>
    %c0_3 = arith.constant 0 : index
    %c0_4 = arith.constant 0 : index
    %9 = vector.load %arg4[%c0_3, %c0_4] : memref<32x128xf32, #tpu.memory_space<vmem>>, vector<32x128xf32>
    %cst_5 = arith.constant dense<0.000000e+00> : vector<2x128xf32>
    %10 = tpu.matmul %8, %9, %cst_5 {dimension_numbers = #tpu.dot_dimension_numbers<[1], [0], [0], [1], [0, 0, 1, 1], [], []>} : vector<2x32xf32>, vector<32x128xf32>, vector<2x128xf32> -> vector<2x128xf32>
    %c0_6 = arith.constant 0 : index
    %c0_7 = arith.constant 0 : index
    %11 = vector.load %arg5[%c0_6, %c0_7] : memref<1x128xf32, #tpu.memory_space<vmem>>, vector<1x128xf32>
    %12 = vector.broadcast %11 : vector<1x128xf32> to vector<2x128xf32>
    %13 = arith.addf %10, %12 : vector<2x128xf32>
    %c0_8 = arith.constant 0 : index
    %c0_9 = arith.constant 0 : index
    %14 = vector.load %arg8[%c0_8, %c0_9] : memref<1x128xf32, #tpu.memory_space<vmem>>, vector<1x128xf32>
    %15 = vector.broadcast %14 : vector<1x128xf32> to vector<2x128xf32>
    %16 = arith.addf %13, %15 : vector<2x128xf32>
    %c0_10 = arith.constant 0 : index
    %c0_11 = arith.constant 0 : index
    %c0_12 = arith.constant 0 : index
    %17 = vector.load %arg0[%c0_10, %c0_11, %c0_12] : memref<2x8x8xbf16, #tpu.memory_space<vmem>>, vector<2x8x8xbf16>
    %18 = vector.shape_cast %17 : vector<2x8x8xbf16> to vector<16x8xbf16>
    %c0_13 = arith.constant 0 : index
    %c0_14 = arith.constant 0 : index
    %19 = vector.load %arg6[%c0_13, %c0_14] : memref<8x128xbf16, #tpu.memory_space<vmem>>, vector<8x128xbf16>
    %cst_15 = arith.constant dense<0.000000e+00> : vector<16x128xf32>
    %20 = tpu.matmul %18, %19, %cst_15 {dimension_numbers = #tpu.dot_dimension_numbers<[1], [0], [0], [1], [0, 0, 1, 1], [], []>} : vector<16x8xbf16>, vector<8x128xbf16>, vector<16x128xf32> -> vector<16x128xf32>
    %21 = vector.shape_cast %20 : vector<16x128xf32> to vector<2x8x128xf32>
    %22 = vector.shape_cast %16 : vector<2x128xf32> to vector<2x1x128xf32>
    %23 = vector.broadcast %22 : vector<2x1x128xf32> to vector<2x8x128xf32>
    %24 = arith.addf %21, %23 : vector<2x8x128xf32>
    %c0_16 = arith.constant 0 : index
    %c0_17 = arith.constant 0 : index
    %25 = vector.load %arg7[%c0_16, %c0_17] : memref<8x128xbf16, #tpu.memory_space<vmem>>, vector<8x128xbf16>
    %cst_18 = arith.constant dense<0.000000e+00> : vector<16x128xf32>
    %26 = tpu.matmul %18, %25, %cst_18 {dimension_numbers = #tpu.dot_dimension_numbers<[1], [0], [0], [1], [0, 0, 1, 1], [], []>} : vector<16x8xbf16>, vector<8x128xbf16>, vector<16x128xf32> -> vector<16x128xf32>
    %27 = vector.shape_cast %26 : vector<16x128xf32> to vector<2x8x128xf32>
    %28 = vector.shape_cast %16 : vector<2x128xf32> to vector<2x1x128xf32>
    %29 = vector.broadcast %28 : vector<2x1x128xf32> to vector<2x8x128xf32>
    %30 = arith.addf %27, %29 : vector<2x8x128xf32>
    %31 = tpu.iota {dimensions = array<i32: 1>} : vector<1x8x128xi32>
    %c0_i32 = arith.constant 0 : i32
    %32 = vector.broadcast %c0_i32 : i32 to vector<1x8x128xi32>
    %33 = arith.cmpi sgt, %31, %32 : vector<1x8x128xi32>
    %34 = arith.extui %33 : vector<1x8x128xi1> to vector<1x8x128xi32>
    %35 = arith.sitofp %34 : vector<1x8x128xi32> to vector<1x8x128xf32>
    %c7_i32 = arith.constant 7 : i32
    %36 = vector.broadcast %c7_i32 : i32 to vector<1x8x128xi32>
    %37 = arith.cmpi slt, %31, %36 : vector<1x8x128xi32>
    %38 = arith.extui %37 : vector<1x8x128xi1> to vector<1x8x128xi32>
    %39 = arith.sitofp %38 : vector<1x8x128xi32> to vector<1x8x128xf32>
    %c0_19 = arith.constant 0 : index
    %c0_20 = arith.constant 0 : index
    %c0_21 = arith.constant 0 : index
    %40 = vector.load %arg1[%c0_19, %c0_20, %c0_21] : memref<2x8x128xf32, #tpu.memory_space<vmem>>, vector<2x8x128xf32>
    %c0_22 = arith.constant 0 : index
    %c0_23 = arith.constant 0 : index
    %c0_24 = arith.constant 0 : index
    %41 = vector.load %arg2[%c0_22, %c0_23, %c0_24] : memref<2x8x128xf32, #tpu.memory_space<vmem>>, vector<2x8x128xf32>
    %42 = arith.truncf %40 : vector<2x8x128xf32> to vector<2x8x128xbf16>
    %43 = arith.truncf %41 : vector<2x8x128xf32> to vector<2x8x128xbf16>
    %c7_i32_25 = arith.constant 7 : i32
    %44 = tpu.dynamic_rotate %40 by %c7_i32_25 dim 1 : vector<2x8x128xf32>, i32 -> vector<2x8x128xf32>
    %45 = vector.broadcast %39 : vector<1x8x128xf32> to vector<2x8x128xf32>
    %46 = arith.mulf %44, %45 : vector<2x8x128xf32>
    %47 = arith.truncf %46 : vector<2x8x128xf32> to vector<2x8x128xbf16>
    %c1_i32 = arith.constant 1 : i32
    %48 = tpu.dynamic_rotate %41 by %c1_i32 dim 1 : vector<2x8x128xf32>, i32 -> vector<2x8x128xf32>
    %49 = vector.broadcast %35 : vector<1x8x128xf32> to vector<2x8x128xf32>
    %50 = arith.mulf %48, %49 : vector<2x8x128xf32>
    %51 = arith.truncf %50 : vector<2x8x128xf32> to vector<2x8x128xbf16>
    %52 = arith.truncf %24 : vector<2x8x128xf32> to vector<2x8x128xbf16>
    %53 = arith.truncf %30 : vector<2x8x128xf32> to vector<2x8x128xbf16>
    %c7_i32_26 = arith.constant 7 : i32
    %54 = tpu.dynamic_rotate %24 by %c7_i32_26 dim 1 : vector<2x8x128xf32>, i32 -> vector<2x8x128xf32>
    %55 = vector.broadcast %39 : vector<1x8x128xf32> to vector<2x8x128xf32>
    %56 = arith.mulf %54, %55 : vector<2x8x128xf32>
    %57 = arith.truncf %56 : vector<2x8x128xf32> to vector<2x8x128xbf16>
    %c1_i32_27 = arith.constant 1 : i32
    %58 = tpu.dynamic_rotate %30 by %c1_i32_27 dim 1 : vector<2x8x128xf32>, i32 -> vector<2x8x128xf32>
    %59 = vector.broadcast %35 : vector<1x8x128xf32> to vector<2x8x128xf32>
    %60 = arith.mulf %58, %59 : vector<2x8x128xf32>
    %61 = arith.truncf %60 : vector<2x8x128xf32> to vector<2x8x128xbf16>
    %c0_28 = arith.constant 0 : index
    %c0_29 = arith.constant 0 : index
    %c0_30 = arith.constant 0 : index
    %62 = vector.load %arg9[%c0_28, %c0_29, %c0_30] : memref<3x128x128xbf16, #tpu.memory_space<vmem>>, vector<1x128x128xbf16>
    %63 = vector.shape_cast %62 : vector<1x128x128xbf16> to vector<128x128xbf16>
    %64 = vector.shape_cast %51 : vector<2x8x128xbf16> to vector<16x128xbf16>
    %cst_31 = arith.constant dense<0.000000e+00> : vector<16x128xf32>
    %65 = tpu.matmul %64, %63, %cst_31 {dimension_numbers = #tpu.dot_dimension_numbers<[1], [0], [0], [1], [0, 0, 1, 1], [], []>} : vector<16x128xbf16>, vector<128x128xbf16>, vector<16x128xf32> -> vector<16x128xf32>
    %c0_32 = arith.constant 0 : index
    %c0_33 = arith.constant 0 : index
    %c0_34 = arith.constant 0 : index
    %66 = vector.load %arg10[%c0_32, %c0_33, %c0_34] : memref<3x128x128xbf16, #tpu.memory_space<vmem>>, vector<1x128x128xbf16>
    %67 = vector.shape_cast %66 : vector<1x128x128xbf16> to vector<128x128xbf16>
    %68 = vector.shape_cast %61 : vector<2x8x128xbf16> to vector<16x128xbf16>
    %cst_35 = arith.constant dense<0.000000e+00> : vector<16x128xf32>
    %69 = tpu.matmul %68, %67, %cst_35 {dimension_numbers = #tpu.dot_dimension_numbers<[1], [0], [0], [1], [0, 0, 1, 1], [], []>} : vector<16x128xbf16>, vector<128x128xbf16>, vector<16x128xf32> -> vector<16x128xf32>
    %70 = arith.addf %65, %69 : vector<16x128xf32>
    %c1 = arith.constant 1 : index
    %c0_36 = arith.constant 0 : index
    %c0_37 = arith.constant 0 : index
    %71 = vector.load %arg9[%c1, %c0_36, %c0_37] : memref<3x128x128xbf16, #tpu.memory_space<vmem>>, vector<1x128x128xbf16>
    %72 = vector.shape_cast %71 : vector<1x128x128xbf16> to vector<128x128xbf16>
    %73 = vector.shape_cast %42 : vector<2x8x128xbf16> to vector<16x128xbf16>
    %cst_38 = arith.constant dense<0.000000e+00> : vector<16x128xf32>
    %74 = tpu.matmul %73, %72, %cst_38 {dimension_numbers = #tpu.dot_dimension_numbers<[1], [0], [0], [1], [0, 0, 1, 1], [], []>} : vector<16x128xbf16>, vector<128x128xbf16>, vector<16x128xf32> -> vector<16x128xf32>
    %75 = arith.addf %70, %74 : vector<16x128xf32>
    %c1_39 = arith.constant 1 : index
    %c0_40 = arith.constant 0 : index
    %c0_41 = arith.constant 0 : index
    %76 = vector.load %arg10[%c1_39, %c0_40, %c0_41] : memref<3x128x128xbf16, #tpu.memory_space<vmem>>, vector<1x128x128xbf16>
    %77 = vector.shape_cast %76 : vector<1x128x128xbf16> to vector<128x128xbf16>
    %78 = vector.shape_cast %52 : vector<2x8x128xbf16> to vector<16x128xbf16>
    %cst_42 = arith.constant dense<0.000000e+00> : vector<16x128xf32>
    %79 = tpu.matmul %78, %77, %cst_42 {dimension_numbers = #tpu.dot_dimension_numbers<[1], [0], [0], [1], [0, 0, 1, 1], [], []>} : vector<16x128xbf16>, vector<128x128xbf16>, vector<16x128xf32> -> vector<16x128xf32>
    %80 = arith.addf %75, %79 : vector<16x128xf32>
    %c2 = arith.constant 2 : index
    %c0_43 = arith.constant 0 : index
    %c0_44 = arith.constant 0 : index
    %81 = vector.load %arg9[%c2, %c0_43, %c0_44] : memref<3x128x128xbf16, #tpu.memory_space<vmem>>, vector<1x128x128xbf16>
    %82 = vector.shape_cast %81 : vector<1x128x128xbf16> to vector<128x128xbf16>
    %83 = vector.shape_cast %43 : vector<2x8x128xbf16> to vector<16x128xbf16>
    %cst_45 = arith.constant dense<0.000000e+00> : vector<16x128xf32>
    %84 = tpu.matmul %83, %82, %cst_45 {dimension_numbers = #tpu.dot_dimension_numbers<[1], [0], [0], [1], [0, 0, 1, 1], [], []>} : vector<16x128xbf16>, vector<128x128xbf16>, vector<16x128xf32> -> vector<16x128xf32>
    %85 = arith.addf %80, %84 : vector<16x128xf32>
    %c2_46 = arith.constant 2 : index
    %c0_47 = arith.constant 0 : index
    %c0_48 = arith.constant 0 : index
    %86 = vector.load %arg10[%c2_46, %c0_47, %c0_48] : memref<3x128x128xbf16, #tpu.memory_space<vmem>>, vector<1x128x128xbf16>
    %87 = vector.shape_cast %86 : vector<1x128x128xbf16> to vector<128x128xbf16>
    %88 = vector.shape_cast %53 : vector<2x8x128xbf16> to vector<16x128xbf16>
    %cst_49 = arith.constant dense<0.000000e+00> : vector<16x128xf32>
    %89 = tpu.matmul %88, %87, %cst_49 {dimension_numbers = #tpu.dot_dimension_numbers<[1], [0], [0], [1], [0, 0, 1, 1], [], []>} : vector<16x128xbf16>, vector<128x128xbf16>, vector<16x128xf32> -> vector<16x128xf32>
    %90 = arith.addf %85, %89 : vector<16x128xf32>
    %c0_50 = arith.constant 0 : index
    %c0_51 = arith.constant 0 : index
    %c0_52 = arith.constant 0 : index
    %91 = vector.load %arg9[%c0_50, %c0_51, %c0_52] : memref<3x128x128xbf16, #tpu.memory_space<vmem>>, vector<1x128x128xbf16>
    %92 = vector.shape_cast %91 : vector<1x128x128xbf16> to vector<128x128xbf16>
    %93 = vector.shape_cast %42 : vector<2x8x128xbf16> to vector<16x128xbf16>
    %cst_53 = arith.constant dense<0.000000e+00> : vector<16x128xf32>
    %94 = tpu.matmul %93, %92, %cst_53 {dimension_numbers = #tpu.dot_dimension_numbers<[1], [0], [0], [1], [0, 0, 1, 1], [], []>} : vector<16x128xbf16>, vector<128x128xbf16>, vector<16x128xf32> -> vector<16x128xf32>
    %c0_54 = arith.constant 0 : index
    %c0_55 = arith.constant 0 : index
    %c0_56 = arith.constant 0 : index
    %95 = vector.load %arg10[%c0_54, %c0_55, %c0_56] : memref<3x128x128xbf16, #tpu.memory_space<vmem>>, vector<1x128x128xbf16>
    %96 = vector.shape_cast %95 : vector<1x128x128xbf16> to vector<128x128xbf16>
    %97 = vector.shape_cast %52 : vector<2x8x128xbf16> to vector<16x128xbf16>
    %cst_57 = arith.constant dense<0.000000e+00> : vector<16x128xf32>
    %98 = tpu.matmul %97, %96, %cst_57 {dimension_numbers = #tpu.dot_dimension_numbers<[1], [0], [0], [1], [0, 0, 1, 1], [], []>} : vector<16x128xbf16>, vector<128x128xbf16>, vector<16x128xf32> -> vector<16x128xf32>
    %99 = arith.addf %94, %98 : vector<16x128xf32>
    %c1_58 = arith.constant 1 : index
    %c0_59 = arith.constant 0 : index
    %c0_60 = arith.constant 0 : index
    %100 = vector.load %arg9[%c1_58, %c0_59, %c0_60] : memref<3x128x128xbf16, #tpu.memory_space<vmem>>, vector<1x128x128xbf16>
    %101 = vector.shape_cast %100 : vector<1x128x128xbf16> to vector<128x128xbf16>
    %102 = vector.shape_cast %43 : vector<2x8x128xbf16> to vector<16x128xbf16>
    %cst_61 = arith.constant dense<0.000000e+00> : vector<16x128xf32>
    %103 = tpu.matmul %102, %101, %cst_61 {dimension_numbers = #tpu.dot_dimension_numbers<[1], [0], [0], [1], [0, 0, 1, 1], [], []>} : vector<16x128xbf16>, vector<128x128xbf16>, vector<16x128xf32> -> vector<16x128xf32>
    %104 = arith.addf %99, %103 : vector<16x128xf32>
    %c1_62 = arith.constant 1 : index
    %c0_63 = arith.constant 0 : index
    %c0_64 = arith.constant 0 : index
    %105 = vector.load %arg10[%c1_62, %c0_63, %c0_64] : memref<3x128x128xbf16, #tpu.memory_space<vmem>>, vector<1x128x128xbf16>
    %106 = vector.shape_cast %105 : vector<1x128x128xbf16> to vector<128x128xbf16>
    %107 = vector.shape_cast %53 : vector<2x8x128xbf16> to vector<16x128xbf16>
    %cst_65 = arith.constant dense<0.000000e+00> : vector<16x128xf32>
    %108 = tpu.matmul %107, %106, %cst_65 {dimension_numbers = #tpu.dot_dimension_numbers<[1], [0], [0], [1], [0, 0, 1, 1], [], []>} : vector<16x128xbf16>, vector<128x128xbf16>, vector<16x128xf32> -> vector<16x128xf32>
    %109 = arith.addf %104, %108 : vector<16x128xf32>
    %c2_66 = arith.constant 2 : index
    %c0_67 = arith.constant 0 : index
    %c0_68 = arith.constant 0 : index
    %110 = vector.load %arg9[%c2_66, %c0_67, %c0_68] : memref<3x128x128xbf16, #tpu.memory_space<vmem>>, vector<1x128x128xbf16>
    %111 = vector.shape_cast %110 : vector<1x128x128xbf16> to vector<128x128xbf16>
    %112 = vector.shape_cast %47 : vector<2x8x128xbf16> to vector<16x128xbf16>
    %cst_69 = arith.constant dense<0.000000e+00> : vector<16x128xf32>
    %113 = tpu.matmul %112, %111, %cst_69 {dimension_numbers = #tpu.dot_dimension_numbers<[1], [0], [0], [1], [0, 0, 1, 1], [], []>} : vector<16x128xbf16>, vector<128x128xbf16>, vector<16x128xf32> -> vector<16x128xf32>
    %114 = arith.addf %109, %113 : vector<16x128xf32>
    %c2_70 = arith.constant 2 : index
    %c0_71 = arith.constant 0 : index
    %c0_72 = arith.constant 0 : index
    %115 = vector.load %arg10[%c2_70, %c0_71, %c0_72] : memref<3x128x128xbf16, #tpu.memory_space<vmem>>, vector<1x128x128xbf16>
    %116 = vector.shape_cast %115 : vector<1x128x128xbf16> to vector<128x128xbf16>
    %117 = vector.shape_cast %57 : vector<2x8x128xbf16> to vector<16x128xbf16>
    %cst_73 = arith.constant dense<0.000000e+00> : vector<16x128xf32>
    %118 = tpu.matmul %117, %116, %cst_73 {dimension_numbers = #tpu.dot_dimension_numbers<[1], [0], [0], [1], [0, 0, 1, 1], [], []>} : vector<16x128xbf16>, vector<128x128xbf16>, vector<16x128xf32> -> vector<16x128xf32>
    %119 = arith.addf %114, %118 : vector<16x128xf32>
    %c0_74 = arith.constant 0 : index
    %c0_75 = arith.constant 0 : index
    %120 = vector.load %arg11[%c0_74, %c0_75] : memref<1x128xf32, #tpu.memory_space<vmem>>, vector<1x128xf32>
    %c0_76 = arith.constant 0 : index
    %c0_77 = arith.constant 0 : index
    %121 = vector.load %arg12[%c0_76, %c0_77] : memref<1x128xf32, #tpu.memory_space<vmem>>, vector<1x128xf32>
    %cst_78 = arith.constant dense<0.000000e+00> : vector<128xf32>
    %122 = vector.multi_reduction <add>, %90, %cst_78 [0] : vector<16x128xf32> to vector<128xf32>
    %123 = vector.shape_cast %122 : vector<128xf32> to vector<1x128xf32>
    %cst_79 = arith.constant dense<0.000000e+00> : vector<128xf32>
    %124 = vector.multi_reduction <add>, %119, %cst_79 [0] : vector<16x128xf32> to vector<128xf32>
    %125 = vector.shape_cast %124 : vector<128xf32> to vector<1x128xf32>
    %126 = arith.addf %123, %125 : vector<1x128xf32>
    %127 = arith.mulf %90, %90 : vector<16x128xf32>
    %cst_80 = arith.constant dense<0.000000e+00> : vector<128xf32>
    %128 = vector.multi_reduction <add>, %127, %cst_80 [0] : vector<16x128xf32> to vector<128xf32>
    %129 = vector.shape_cast %128 : vector<128xf32> to vector<1x128xf32>
    %130 = arith.mulf %119, %119 : vector<16x128xf32>
    %cst_81 = arith.constant dense<0.000000e+00> : vector<128xf32>
    %131 = vector.multi_reduction <add>, %130, %cst_81 [0] : vector<16x128xf32> to vector<128xf32>
    %132 = vector.shape_cast %131 : vector<128xf32> to vector<1x128xf32>
    %133 = arith.addf %129, %132 : vector<1x128xf32>
    %cst_82 = arith.constant 3.200000e+01 : f32
    %134 = vector.broadcast %cst_82 : f32 to vector<1x128xf32>
    %135 = arith.divf %126, %134 : vector<1x128xf32>
    %cst_83 = arith.constant 3.200000e+01 : f32
    %136 = vector.broadcast %cst_83 : f32 to vector<1x128xf32>
    %137 = arith.divf %133, %136 : vector<1x128xf32>
    %138 = arith.mulf %135, %135 : vector<1x128xf32>
    %139 = arith.subf %137, %138 : vector<1x128xf32>
    %cst_84 = arith.constant 0.000000e+00 : f32
    %140 = vector.broadcast %cst_84 : f32 to vector<1x128xf32>
    %141 = arith.maximumf %139, %140 : vector<1x128xf32>
    %cst_85 = arith.constant 9.99999974E-6 : f32
    %142 = vector.broadcast %cst_85 : f32 to vector<1x128xf32>
    %143 = arith.addf %141, %142 : vector<1x128xf32>
    %144 = math.rsqrt %143 : vector<1x128xf32>
    %145 = arith.mulf %120, %144 : vector<1x128xf32>
    %146 = arith.mulf %135, %145 : vector<1x128xf32>
    %147 = arith.subf %121, %146 : vector<1x128xf32>
    %148 = vector.broadcast %145 : vector<1x128xf32> to vector<16x128xf32>
    %149 = arith.mulf %90, %148 : vector<16x128xf32>
    %150 = vector.broadcast %147 : vector<1x128xf32> to vector<16x128xf32>
    %151 = arith.addf %149, %150 : vector<16x128xf32>
    %cst_86 = arith.constant 0.000000e+00 : f32
    %152 = vector.broadcast %cst_86 : f32 to vector<16x128xf32>
    %153 = arith.maximumf %151, %152 : vector<16x128xf32>
    %154 = vector.shape_cast %153 : vector<16x128xf32> to vector<2x8x128xf32>
    %155 = vector.broadcast %145 : vector<1x128xf32> to vector<16x128xf32>
    %156 = arith.mulf %119, %155 : vector<16x128xf32>
    %157 = vector.broadcast %147 : vector<1x128xf32> to vector<16x128xf32>
    %158 = arith.addf %156, %157 : vector<16x128xf32>
    %cst_87 = arith.constant 0.000000e+00 : f32
    %159 = vector.broadcast %cst_87 : f32 to vector<16x128xf32>
    %160 = arith.maximumf %158, %159 : vector<16x128xf32>
    %161 = vector.shape_cast %160 : vector<16x128xf32> to vector<2x8x128xf32>
    %162 = arith.truncf %154 : vector<2x8x128xf32> to vector<2x8x128xbf16>
    %163 = arith.truncf %161 : vector<2x8x128xf32> to vector<2x8x128xbf16>
    %c7_i32_88 = arith.constant 7 : i32
    %164 = tpu.dynamic_rotate %154 by %c7_i32_88 dim 1 : vector<2x8x128xf32>, i32 -> vector<2x8x128xf32>
    %165 = vector.broadcast %39 : vector<1x8x128xf32> to vector<2x8x128xf32>
    %166 = arith.mulf %164, %165 : vector<2x8x128xf32>
    %167 = arith.truncf %166 : vector<2x8x128xf32> to vector<2x8x128xbf16>
    %c1_i32_89 = arith.constant 1 : i32
    %168 = tpu.dynamic_rotate %161 by %c1_i32_89 dim 1 : vector<2x8x128xf32>, i32 -> vector<2x8x128xf32>
    %169 = vector.broadcast %35 : vector<1x8x128xf32> to vector<2x8x128xf32>
    %170 = arith.mulf %168, %169 : vector<2x8x128xf32>
    %171 = arith.truncf %170 : vector<2x8x128xf32> to vector<2x8x128xbf16>
    %c0_90 = arith.constant 0 : index
    %c0_91 = arith.constant 0 : index
    %c0_92 = arith.constant 0 : index
    %172 = vector.load %arg13[%c0_90, %c0_91, %c0_92] : memref<3x128x128xbf16, #tpu.memory_space<vmem>>, vector<1x128x128xbf16>
    %173 = vector.shape_cast %172 : vector<1x128x128xbf16> to vector<128x128xbf16>
    %174 = vector.shape_cast %171 : vector<2x8x128xbf16> to vector<16x128xbf16>
    %cst_93 = arith.constant dense<0.000000e+00> : vector<16x128xf32>
    %175 = tpu.matmul %174, %173, %cst_93 {dimension_numbers = #tpu.dot_dimension_numbers<[1], [0], [0], [1], [0, 0, 1, 1], [], []>} : vector<16x128xbf16>, vector<128x128xbf16>, vector<16x128xf32> -> vector<16x128xf32>
    %c1_94 = arith.constant 1 : index
    %c0_95 = arith.constant 0 : index
    %c0_96 = arith.constant 0 : index
    %176 = vector.load %arg13[%c1_94, %c0_95, %c0_96] : memref<3x128x128xbf16, #tpu.memory_space<vmem>>, vector<1x128x128xbf16>
    %177 = vector.shape_cast %176 : vector<1x128x128xbf16> to vector<128x128xbf16>
    %178 = vector.shape_cast %162 : vector<2x8x128xbf16> to vector<16x128xbf16>
    %cst_97 = arith.constant dense<0.000000e+00> : vector<16x128xf32>
    %179 = tpu.matmul %178, %177, %cst_97 {dimension_numbers = #tpu.dot_dimension_numbers<[1], [0], [0], [1], [0, 0, 1, 1], [], []>} : vector<16x128xbf16>, vector<128x128xbf16>, vector<16x128xf32> -> vector<16x128xf32>
    %180 = arith.addf %175, %179 : vector<16x128xf32>
    %c2_98 = arith.constant 2 : index
    %c0_99 = arith.constant 0 : index
    %c0_100 = arith.constant 0 : index
    %181 = vector.load %arg13[%c2_98, %c0_99, %c0_100] : memref<3x128x128xbf16, #tpu.memory_space<vmem>>, vector<1x128x128xbf16>
    %182 = vector.shape_cast %181 : vector<1x128x128xbf16> to vector<128x128xbf16>
    %183 = vector.shape_cast %163 : vector<2x8x128xbf16> to vector<16x128xbf16>
    %cst_101 = arith.constant dense<0.000000e+00> : vector<16x128xf32>
    %184 = tpu.matmul %183, %182, %cst_101 {dimension_numbers = #tpu.dot_dimension_numbers<[1], [0], [0], [1], [0, 0, 1, 1], [], []>} : vector<16x128xbf16>, vector<128x128xbf16>, vector<16x128xf32> -> vector<16x128xf32>
    %185 = arith.addf %180, %184 : vector<16x128xf32>
    %c0_102 = arith.constant 0 : index
    %c0_103 = arith.constant 0 : index
    %c0_104 = arith.constant 0 : index
    %186 = vector.load %arg13[%c0_102, %c0_103, %c0_104] : memref<3x128x128xbf16, #tpu.memory_space<vmem>>, vector<1x128x128xbf16>
    %187 = vector.shape_cast %186 : vector<1x128x128xbf16> to vector<128x128xbf16>
    %188 = vector.shape_cast %162 : vector<2x8x128xbf16> to vector<16x128xbf16>
    %cst_105 = arith.constant dense<0.000000e+00> : vector<16x128xf32>
    %189 = tpu.matmul %188, %187, %cst_105 {dimension_numbers = #tpu.dot_dimension_numbers<[1], [0], [0], [1], [0, 0, 1, 1], [], []>} : vector<16x128xbf16>, vector<128x128xbf16>, vector<16x128xf32> -> vector<16x128xf32>
    %c1_106 = arith.constant 1 : index
    %c0_107 = arith.constant 0 : index
    %c0_108 = arith.constant 0 : index
    %190 = vector.load %arg13[%c1_106, %c0_107, %c0_108] : memref<3x128x128xbf16, #tpu.memory_space<vmem>>, vector<1x128x128xbf16>
    %191 = vector.shape_cast %190 : vector<1x128x128xbf16> to vector<128x128xbf16>
    %192 = vector.shape_cast %163 : vector<2x8x128xbf16> to vector<16x128xbf16>
    %cst_109 = arith.constant dense<0.000000e+00> : vector<16x128xf32>
    %193 = tpu.matmul %192, %191, %cst_109 {dimension_numbers = #tpu.dot_dimension_numbers<[1], [0], [0], [1], [0, 0, 1, 1], [], []>} : vector<16x128xbf16>, vector<128x128xbf16>, vector<16x128xf32> -> vector<16x128xf32>
    %194 = arith.addf %189, %193 : vector<16x128xf32>
    %c2_110 = arith.constant 2 : index
    %c0_111 = arith.constant 0 : index
    %c0_112 = arith.constant 0 : index
    %195 = vector.load %arg13[%c2_110, %c0_111, %c0_112] : memref<3x128x128xbf16, #tpu.memory_space<vmem>>, vector<1x128x128xbf16>
    %196 = vector.shape_cast %195 : vector<1x128x128xbf16> to vector<128x128xbf16>
    %197 = vector.shape_cast %167 : vector<2x8x128xbf16> to vector<16x128xbf16>
    %cst_113 = arith.constant dense<0.000000e+00> : vector<16x128xf32>
    %198 = tpu.matmul %197, %196, %cst_113 {dimension_numbers = #tpu.dot_dimension_numbers<[1], [0], [0], [1], [0, 0, 1, 1], [], []>} : vector<16x128xbf16>, vector<128x128xbf16>, vector<16x128xf32> -> vector<16x128xf32>
    %199 = arith.addf %194, %198 : vector<16x128xf32>
    %c0_114 = arith.constant 0 : index
    %c0_115 = arith.constant 0 : index
    %200 = vector.load %arg14[%c0_114, %c0_115] : memref<1x128xf32, #tpu.memory_space<vmem>>, vector<1x128xf32>
    %c0_116 = arith.constant 0 : index
    %c0_117 = arith.constant 0 : index
    %201 = vector.load %arg15[%c0_116, %c0_117] : memref<1x128xf32, #tpu.memory_space<vmem>>, vector<1x128xf32>
    %cst_118 = arith.constant dense<0.000000e+00> : vector<128xf32>
    %202 = vector.multi_reduction <add>, %185, %cst_118 [0] : vector<16x128xf32> to vector<128xf32>
    %203 = vector.shape_cast %202 : vector<128xf32> to vector<1x128xf32>
    %cst_119 = arith.constant dense<0.000000e+00> : vector<128xf32>
    %204 = vector.multi_reduction <add>, %199, %cst_119 [0] : vector<16x128xf32> to vector<128xf32>
    %205 = vector.shape_cast %204 : vector<128xf32> to vector<1x128xf32>
    %206 = arith.addf %203, %205 : vector<1x128xf32>
    %207 = arith.mulf %185, %185 : vector<16x128xf32>
    %cst_120 = arith.constant dense<0.000000e+00> : vector<128xf32>
    %208 = vector.multi_reduction <add>, %207, %cst_120 [0] : vector<16x128xf32> to vector<128xf32>
    %209 = vector.shape_cast %208 : vector<128xf32> to vector<1x128xf32>
    %210 = arith.mulf %199, %199 : vector<16x128xf32>
    %cst_121 = arith.constant dense<0.000000e+00> : vector<128xf32>
    %211 = vector.multi_reduction <add>, %210, %cst_121 [0] : vector<16x128xf32> to vector<128xf32>
    %212 = vector.shape_cast %211 : vector<128xf32> to vector<1x128xf32>
    %213 = arith.addf %209, %212 : vector<1x128xf32>
    %cst_122 = arith.constant 3.200000e+01 : f32
    %214 = vector.broadcast %cst_122 : f32 to vector<1x128xf32>
    %215 = arith.divf %206, %214 : vector<1x128xf32>
    %cst_123 = arith.constant 3.200000e+01 : f32
    %216 = vector.broadcast %cst_123 : f32 to vector<1x128xf32>
    %217 = arith.divf %213, %216 : vector<1x128xf32>
    %218 = arith.mulf %215, %215 : vector<1x128xf32>
    %219 = arith.subf %217, %218 : vector<1x128xf32>
    %cst_124 = arith.constant 0.000000e+00 : f32
    %220 = vector.broadcast %cst_124 : f32 to vector<1x128xf32>
    %221 = arith.maximumf %219, %220 : vector<1x128xf32>
    %cst_125 = arith.constant 9.99999974E-6 : f32
    %222 = vector.broadcast %cst_125 : f32 to vector<1x128xf32>
    %223 = arith.addf %221, %222 : vector<1x128xf32>
    %224 = math.rsqrt %223 : vector<1x128xf32>
    %225 = arith.mulf %200, %224 : vector<1x128xf32>
    %226 = arith.mulf %215, %225 : vector<1x128xf32>
    %227 = arith.subf %201, %226 : vector<1x128xf32>
    %228 = vector.broadcast %225 : vector<1x128xf32> to vector<16x128xf32>
    %229 = arith.mulf %185, %228 : vector<16x128xf32>
    %230 = vector.broadcast %227 : vector<1x128xf32> to vector<16x128xf32>
    %231 = arith.addf %229, %230 : vector<16x128xf32>
    %cst_126 = arith.constant 0.000000e+00 : f32
    %232 = vector.broadcast %cst_126 : f32 to vector<16x128xf32>
    %233 = arith.maximumf %231, %232 : vector<16x128xf32>
    %234 = vector.shape_cast %233 : vector<16x128xf32> to vector<2x8x128xf32>
    %c0_127 = arith.constant 0 : index
    %c0_128 = arith.constant 0 : index
    %c0_129 = arith.constant 0 : index
    %235 = vector.load %arg16[%c0_127, %c0_128, %c0_129] : memref<2x8x256xf32, #tpu.memory_space<vmem>>, vector<2x8x128xf32>
    tpu.vector_store %arg16[%c0_127, %c0_128, %c0_129], %234 {strides = array<i32>} : memref<2x8x256xf32, #tpu.memory_space<vmem>>, vector<2x8x128xf32>,
    %236 = vector.broadcast %225 : vector<1x128xf32> to vector<16x128xf32>
    %237 = arith.mulf %199, %236 : vector<16x128xf32>
    %238 = vector.broadcast %227 : vector<1x128xf32> to vector<16x128xf32>
    %239 = arith.addf %237, %238 : vector<16x128xf32>
    %cst_130 = arith.constant 0.000000e+00 : f32
    %240 = vector.broadcast %cst_130 : f32 to vector<16x128xf32>
    %241 = arith.maximumf %239, %240 : vector<16x128xf32>
    %242 = vector.shape_cast %241 : vector<16x128xf32> to vector<2x8x128xf32>
    %c0_131 = arith.constant 0 : index
    %c0_132 = arith.constant 0 : index
    %c128 = arith.constant 128 : index
    %243 = vector.load %arg16[%c0_131, %c0_132, %c128] : memref<2x8x256xf32, #tpu.memory_space<vmem>>, vector<2x8x128xf32>
    tpu.vector_store %arg16[%c0_131, %c0_132, %c128], %242 {strides = array<i32>} : memref<2x8x256xf32, #tpu.memory_space<vmem>>, vector<2x8x128xf32>,
    return
  }
}

</mosaic_0001>

<llo_original>
// kernel: upsample_block.1
$region0: #{upsample_block.1}
  #allocation0 [shape = 'u32[]', space=smem, size = 0x4, offset = 0x4, fixed_abs, tag = 'smem constant byte address 0x4 - core index']
  #allocation1 [shape = 'u32[144,128]{1,0:T(1,128)}', space=vmem, size = 0x12000, scoped, tag = 'internal scratch']
  %s0 = inlined_call_operand.vmem [shape: bf16[2,8,8], index: 0, kind: input, shape index: {}]
  %s1 = inlined_call_operand.vmem [shape: f32[2,8,128], index: 1, kind: input, shape index: {}]
  %s2 = inlined_call_operand.vmem [shape: f32[2,8,128], index: 2, kind: input, shape index: {}]
  %s3 = inlined_call_operand.vmem [shape: f32[2,32], index: 3, kind: input, shape index: {}]
  %s4 = inlined_call_operand.vmem [shape: f32[32,128], index: 4, kind: input, shape index: {}]
  %s5 = inlined_call_operand.vmem [shape: f32[1,128], index: 5, kind: input, shape index: {}]
  %s6 = inlined_call_operand.vmem [shape: bf16[8,128], index: 6, kind: input, shape index: {}]
  %s7 = inlined_call_operand.vmem [shape: bf16[8,128], index: 7, kind: input, shape index: {}]
  %s8 = inlined_call_operand.vmem [shape: f32[1,128], index: 8, kind: input, shape index: {}]
  %s9 = inlined_call_operand.vmem [shape: bf16[3,128,128], index: 9, kind: input, shape index: {}]
  %s10 = inlined_call_operand.vmem [shape: bf16[3,128,128], index: 10, kind: input, shape index: {}]
  %s11 = inlined_call_operand.vmem [shape: f32[1,128], index: 11, kind: input, shape index: {}]
  %s12 = inlined_call_operand.vmem [shape: f32[1,128], index: 12, kind: input, shape index: {}]
  %s13 = inlined_call_operand.vmem [shape: bf16[3,128,128], index: 13, kind: input, shape index: {}]
  %s14 = inlined_call_operand.vmem [shape: f32[1,128], index: 14, kind: input, shape index: {}]
  %s15 = inlined_call_operand.vmem [shape: f32[1,128], index: 15, kind: input, shape index: {}]
  %s16 = inlined_call_operand.vmem [shape: f32[2,8,256], index: 16, kind: output, shape index: {}]
  %s17 = sld [smem:[#allocation0]]
  $region74: #{upsample_block.1} parent=0
    _
  %s19 = ssub.s32 1, %s17
  %s20 = scalar_select 0, %s19, %s17
  // Predicated region
  $region2: #{upsample_block.1} parent=0 // pred_check
    _
  $region3: #{upsample_block.1} parent=0 // pred_check_branch
    %22 = sbr.rel (0) target = $region5
  $region4: #{upsample_block.1} parent=0 // pred_region
    _
  $region5: #{upsample_block.1} parent=0 // pred_fallthru
    _
  // Predicated region
  $region6: #{upsample_block.1} parent=0 // pred_check
    _
  $region7: #{upsample_block.1} parent=0 // pred_check_branch
    %24 = sbr.rel (0) target = $region9
  $region8: #{upsample_block.1} parent=0 // pred_region
    _
  $region9: #{upsample_block.1} parent=0 // pred_fallthru
    _
  // Predicated region
  $region10: #{upsample_block.1} parent=0 // pred_check
    _
  $region11: #{upsample_block.1} parent=0 // pred_check_branch
    %26 = sbr.rel (0) target = $region13
  $region12: #{upsample_block.1} parent=0 // pred_region
    _
  $region13: #{upsample_block.1} parent=0 // pred_fallthru
    _
  // Predicated region
  $region14: #{upsample_block.1} parent=0 // pred_check
    _
  $region15: #{upsample_block.1} parent=0 // pred_check_branch
    %28 = sbr.rel (0) target = $region17
  $region16: #{upsample_block.1} parent=0 // pred_region
    _
  $region17: #{upsample_block.1} parent=0 // pred_fallthru
    _
  // Predicated region
  $region18: #{upsample_block.1} parent=0 // pred_check
    _
  $region19: #{upsample_block.1} parent=0 // pred_check_branch
    %30 = sbr.rel (0) target = $region21
  $region20: #{upsample_block.1} parent=0 // pred_region
    _
  $region21: #{upsample_block.1} parent=0 // pred_fallthru
    _
  // Predicated region
  $region22: #{upsample_block.1} parent=0 // pred_check
    _
  $region23: #{upsample_block.1} parent=0 // pred_check_branch
    %32 = sbr.rel (0) target = $region25
  $region24: #{upsample_block.1} parent=0 // pred_region
    _
  $region25: #{upsample_block.1} parent=0 // pred_fallthru
    _
  // Predicated region
  $region26: #{upsample_block.1} parent=0 // pred_check
    _
  $region27: #{upsample_block.1} parent=0 // pred_check_branch
    %34 = sbr.rel (0) target = $region29
  $region28: #{upsample_block.1} parent=0 // pred_region
    _
  $region29: #{upsample_block.1} parent=0 // pred_fallthru
    _
  // Predicated region
  $region30: #{upsample_block.1} parent=0 // pred_check
    _
  $region31: #{upsample_block.1} parent=0 // pred_check_branch
    %36 = sbr.rel (0) target = $region33
  $region32: #{upsample_block.1} parent=0 // pred_region
    _
  $region33: #{upsample_block.1} parent=0 // pred_fallthru
    _
  // Predicated region
  $region34: #{upsample_block.1} parent=0 // pred_check
    _
  $region35: #{upsample_block.1} parent=0 // pred_check_branch
    %38 = sbr.rel (0) target = $region37
  $region36: #{upsample_block.1} parent=0 // pred_region
    _
  $region37: #{upsample_block.1} parent=0 // pred_fallthru
    _
  // Predicated region
  $region38: #{upsample_block.1} parent=0 // pred_check
    _
  $region39: #{upsample_block.1} parent=0 // pred_check_branch
    %40 = sbr.rel (0) target = $region41
  $region40: #{upsample_block.1} parent=0 // pred_region
    _
  $region41: #{upsample_block.1} parent=0 // pred_fallthru
    _
  // Predicated region
  $region42: #{upsample_block.1} parent=0 // pred_check
    _
  $region43: #{upsample_block.1} parent=0 // pred_check_branch
    %42 = sbr.rel (0) target = $region45
  $region44: #{upsample_block.1} parent=0 // pred_region
    _
  $region45: #{upsample_block.1} parent=0 // pred_fallthru
    _
  // Predicated region
  $region46: #{upsample_block.1} parent=0 // pred_check
    _
  $region47: #{upsample_block.1} parent=0 // pred_check_branch
    %44 = sbr.rel (0) target = $region49
  $region48: #{upsample_block.1} parent=0 // pred_region
    _
  $region49: #{upsample_block.1} parent=0 // pred_fallthru
    _
  // Predicated region
  $region50: #{upsample_block.1} parent=0 // pred_check
    _
  $region51: #{upsample_block.1} parent=0 // pred_check_branch
    %46 = sbr.rel (0) target = $region53
  $region52: #{upsample_block.1} parent=0 // pred_region
    _
  $region53: #{upsample_block.1} parent=0 // pred_fallthru
    _
  // Predicated region
  $region54: #{upsample_block.1} parent=0 // pred_check
    _
  $region55: #{upsample_block.1} parent=0 // pred_check_branch
    %48 = sbr.rel (0) target = $region57
  $region56: #{upsample_block.1} parent=0 // pred_region
    _
  $region57: #{upsample_block.1} parent=0 // pred_fallthru
    _
  // Predicated region
  $region58: #{upsample_block.1} parent=0 // pred_check
    _
  $region59: #{upsample_block.1} parent=0 // pred_check_branch
    %50 = sbr.rel (0) target = $region61
  $region60: #{upsample_block.1} parent=0 // pred_region
    _
  $region61: #{upsample_block.1} parent=0 // pred_fallthru
    _
  // Predicated region
  $region62: #{upsample_block.1} parent=0 // pred_check
    _
  $region63: #{upsample_block.1} parent=0 // pred_check_branch
    %52 = sbr.rel (0) target = $region65
  $region64: #{upsample_block.1} parent=0 // pred_region
    _
  $region65: #{upsample_block.1} parent=0 // pred_fallthru
    _
  %v54 = vld [vmem:[%s3] sm:$0x3]
  %v55 = vsub.f32 0.0, %v54
  %v56 = vmul.f32 %v55, 1.442695
  %v57 = vpow.pop %v56
  %v58 = vadd.f32 %v57, 1.0
  %v59 = vrcp.pop %v58
  %v60 = vmul.f32 1.0, %v59
  %v61 = vmul.f32 %v54, %v60
  %v62 = vld [vmem:[%s4] sm:$0xff]
  %v63 = vld [vmem:[%s4 + $0x8] sm:$0xff]
  %v64 = vld [vmem:[%s4 + $0x10] sm:$0xff]
  %v65 = vld [vmem:[%s4 + $0x18] sm:$0xff]
  %v66 = vld [vmem:[%s5] sm:$0x1]
  %v68 = vlaneseq
  %v69 = vshrl.u32 %v68, 7
  %v70 = vsub.s32 0, %v69
  %v71 = vrot.slane %v66, %v70
  %vm73 = vcmask 261120
  %v75 = vsel %vm73, %v61, 0
  %77 = vmatprep.subr.mxu0 0.0
  %78 = vmatpush1.msra.mxu0 %v62
  %79 = vmatprep.subr.mxu0 0.0
  %80 = vmatpush1.msra.mxu0 %v63
  %81 = vmatprep.subr.mxu0 0.0
  %82 = vmatpush1.msra.mxu0 %v64
  %83 = vmatprep.subr.mxu0 0.0
  %84 = vmatpush1.msra.mxu0 %v65
  %85 = vmatprep.subr.mxu0 0.0
  %86 = vmatpush1.msra.mxu0 0.0
  %87 = vmatprep.subr.mxu0 0.0
  %88 = vmatpush1.msra.mxu0 0.0
  %89 = vmatprep.subr.mxu0 0.0
  %90 = vmatpush1.msra.mxu0 0.0
  %91 = vmatprep.subr.mxu0 0.0
  %92 = vmatpush1.msra.mxu0 0.0
  %93 = vmatprep.subr.mxu0 0.0
  %94 = vmatpush1.msra.mxu0 0.0
  %95 = vmatprep.subr.mxu0 0.0
  %96 = vmatpush1.msra.mxu0 0.0
  %97 = vmatprep.subr.mxu0 0.0
  %98 = vmatpush1.msra.mxu0 0.0
  %99 = vmatprep.subr.mxu0 0.0
  %100 = vmatpush1.msra.mxu0 0.0
  %101 = vmatprep.subr.mxu0 0.0
  %102 = vmatpush1.msra.mxu0 0.0
  %103 = vmatprep.subr.mxu0 0.0
  %104 = vmatpush1.msra.mxu0 0.0
  %105 = vmatprep.subr.mxu0 0.0
  %106 = vmatpush1.msra.mxu0 0.0
  %107 = vmatprep.subr.mxu0 0.0
  %108 = vmatpush1.msra.mxu0 0.0
  %109 = vmatprep.subr.mxu0 0.0
  %110 = vmatpush1.msra.mxu0 0.0
  %111 = vmatprep.subr.mxu0 0.0
  %112 = vmatpush1.msra.mxu0 0.0
  %113 = vmatprep.subr.mxu0 0.0
  %114 = vmatpush1.msra.mxu0 0.0
  %115 = vmatprep.subr.mxu0 0.0
  %116 = vmatpush1.msra.mxu0 0.0
  %117 = vmatprep.subr.mxu0 0.0
  %118 = vmatpush1.msra.mxu0 0.0
  %119 = vmatprep.subr.mxu0 0.0
  %120 = vmatpush1.msra.mxu0 0.0
  %121 = vmatprep.subr.mxu0 0.0
  %122 = vmatpush1.msra.mxu0 0.0
  %123 = vmatprep.subr.mxu0 0.0
  %124 = vmatpush1.msra.mxu0 0.0
  %125 = vmatprep.subr.mxu0 0.0
  %126 = vmatpush1.msra.mxu0 0.0
  %127 = vmatprep.subr.mxu0 0.0
  %128 = vmatpush1.msra.mxu0 0.0
  %129 = vmatprep.subr.mxu0 0.0
  %130 = vmatpush1.msra.mxu0 0.0
  %131 = vmatprep.subr.mxu0 0.0
  %132 = vmatpush1.msra.mxu0 0.0
  %133 = vmatprep.subr.mxu0 0.0
  %134 = vmatpush1.msra.mxu0 0.0
  %135 = vmatprep.subr.mxu0 0.0
  %136 = vmatpush1.msra.mxu0 0.0
  %137 = vmatprep.subr.mxu0 0.0
  %138 = vmatpush1.msra.mxu0 0.0
  %139 = vmatprep.subr.mxu0 0.0
  %140 = vmatpush1.msra.mxu0 0.0
  %141 = vmatprep.mubr.f32.mxu0 0.0
  %142 = vmatmul.mubr.f32.gmra.mrb[0].mxu0 %v75
  %v143 = vpop.f32.mrb[0].mxu0
  %v144 = vadd.f32 %v71, %v143
  %v145 = vpop.f32.mrb[0].mxu0
  %146 = vdwg.mxu0
  %v147 = vld [vmem:[%s8] sm:$0x1]
  %v149 = vlaneseq
  %v150 = vshrl.u32 %v149, 7
  %v151 = vsub.s32 0, %v150
  %v152 = vrot.slane %v147, %v151
  %v154 = vadd.f32 %v144, %v152
  %v155 = vld [vmem:[%s0] sm:$0xf]
  %v156 = vld [vmem:[%s0 + $0x4] sm:$0xf]
  %v157 = vld [vmem:[%s6] sm:$0xf]
  %v160 = vunpack.c.l.b16 %v155
  %v161 = vunpack.c.l.b16 %v156
  %v162 = vpack.c.b16 %v161, %v160
  %vm163 = vcmask 64512
  %v165 = vsel %vm163, %v162, 0
  %vm167 = vcmask 1043456
  %v169 = vsel %vm167, %v157, 0
  %171 = vmatprep.subr.bf16.mxu0 0
  %172 = vmatpush1.bf16.msra.mxu0 %v169
  %173 = vmatprep.subr.bf16.mxu0 0
  %174 = vmatpush1.bf16.msra.mxu0 0
  %175 = vmatprep.subr.bf16.mxu0 0
  %176 = vmatpush1.bf16.msra.mxu0 0
  %177 = vmatprep.subr.bf16.mxu0 0
  %178 = vmatpush1.bf16.msra.mxu0 0
  %179 = vmatprep.subr.bf16.mxu0 0
  %180 = vmatpush1.bf16.msra.mxu0 0
  %181 = vmatprep.subr.bf16.mxu0 0
  %182 = vmatpush1.bf16.msra.mxu0 0
  %183 = vmatprep.subr.bf16.mxu0 0
  %184 = vmatpush1.bf16.msra.mxu0 0
  %185 = vmatprep.subr.bf16.mxu0 0
  %186 = vmatpush1.bf16.msra.mxu0 0
  %187 = vmatprep.subr.bf16.mxu0 0
  %188 = vmatpush1.bf16.msra.mxu0 0
  %189 = vmatprep.subr.bf16.mxu0 0
  %190 = vmatpush1.bf16.msra.mxu0 0
  %191 = vmatprep.subr.bf16.mxu0 0
  %192 = vmatpush1.bf16.msra.mxu0 0
  %193 = vmatprep.subr.bf16.mxu0 0
  %194 = vmatpush1.bf16.msra.mxu0 0
  %195 = vmatprep.subr.bf16.mxu0 0
  %196 = vmatpush1.bf16.msra.mxu0 0
  %197 = vmatprep.subr.bf16.mxu0 0
  %198 = vmatpush1.bf16.msra.mxu0 0
  %199 = vmatprep.subr.bf16.mxu0 0
  %200 = vmatpush1.bf16.msra.mxu0 0
  %201 = vmatprep.subr.bf16.mxu0 0
  %202 = vmatpush1.bf16.msra.mxu0 0
  %203 = vmatprep.mubr.bf16.mxu0 0
  %204 = vmatmul.mubr.bf16.gmra.mrb[0].mxu0 %v165
  %v205 = vpop.f32.mrb[0].mxu0
  %v206 = vadd.f32 0.0, %v205
  %v207 = vpop.f32.mrb[0].mxu0
  %v208 = vpop.f32.mrb[0].mxu0
  %v209 = vadd.f32 0.0, %v208
  %v210 = vpop.f32.mrb[0].mxu0
  %211 = vdwg.mxu0
  %v214 = vunpack.c.l.s4 1966171168
  %v215 = vunpack.c.0.s8 %v214
  %v216 = vlaneseq
  %v217 = vshrl.u32 %v216, 7
  %v218 = vsub.s32 %v215, %v217
  %v219 = vrot.slane %v154, %v218
  %v220 = vcombine.high %v219, %v219
  %v222 = vunpack.c.l.s4 1966171168
  %v223 = vunpack.c.0.s8 %v222
  %v224 = vlaneseq
  %v225 = vshrl.u32 %v224, 7
  %v226 = vsub.s32 %v223, %v225
  %v227 = vrot.slane %v219, %v226
  %v229 = vunpack.c.l.s4 1966171168
  %v230 = vunpack.c.0.s8 %v229
  %v231 = vlaneseq
  %v232 = vshrl.u32 %v231, 7
  %v233 = vsub.s32 %v230, %v232
  %v234 = vrot.slane %v220, %v233
  %v235 = vlaneseq
  %v236 = vshrl.u32 %v235, 7
  %v237 = vsub.s32 0, %v236
  %v238 = vrot.slane %v227, %v237
  %v239 = vlaneseq
  %v240 = vshrl.u32 %v239, 7
  %v241 = vsub.s32 0, %v240
  %v242 = vrot.slane %v234, %v241
  %v245 = vadd.f32 %v206, %v238
  %v246 = vadd.f32 %v209, %v242
  %v247 = vld [vmem:[%s7] sm:$0xf]
  %v249 = vsel %vm167, %v247, 0
  %251 = vmatprep.subr.bf16.mxu0 0
  %252 = vmatpush1.bf16.msra.mxu0 %v249
  %253 = vmatprep.subr.bf16.mxu0 0
  %254 = vmatpush1.bf16.msra.mxu0 0
  %255 = vmatprep.subr.bf16.mxu0 0
  %256 = vmatpush1.bf16.msra.mxu0 0
  %257 = vmatprep.subr.bf16.mxu0 0
  %258 = vmatpush1.bf16.msra.mxu0 0
  %259 = vmatprep.subr.bf16.mxu0 0
  %260 = vmatpush1.bf16.msra.mxu0 0
  %261 = vmatprep.subr.bf16.mxu0 0
  %262 = vmatpush1.bf16.msra.mxu0 0
  %263 = vmatprep.subr.bf16.mxu0 0
  %264 = vmatpush1.bf16.msra.mxu0 0
  %265 = vmatprep.subr.bf16.mxu0 0
  %266 = vmatpush1.bf16.msra.mxu0 0
  %267 = vmatprep.subr.bf16.mxu0 0
  %268 = vmatpush1.bf16.msra.mxu0 0
  %269 = vmatprep.subr.bf16.mxu0 0
  %270 = vmatpush1.bf16.msra.mxu0 0
  %271 = vmatprep.subr.bf16.mxu0 0
  %272 = vmatpush1.bf16.msra.mxu0 0
  %273 = vmatprep.subr.bf16.mxu0 0
  %274 = vmatpush1.bf16.msra.mxu0 0
  %275 = vmatprep.subr.bf16.mxu0 0
  %276 = vmatpush1.bf16.msra.mxu0 0
  %277 = vmatprep.subr.bf16.mxu0 0
  %278 = vmatpush1.bf16.msra.mxu0 0
  %279 = vmatprep.subr.bf16.mxu0 0
  %280 = vmatpush1.bf16.msra.mxu0 0
  %281 = vmatprep.subr.bf16.mxu0 0
  %282 = vmatpush1.bf16.msra.mxu0 0
  %283 = vmatprep.mubr.bf16.mxu0 0
  %284 = vmatmul.mubr.bf16.gmra.mrb[0].mxu0 %v165
  %v285 = vpop.f32.mrb[0].mxu0
  %v286 = vadd.f32 0.0, %v285
  %v287 = vpop.f32.mrb[0].mxu0
  %v288 = vpop.f32.mrb[0].mxu0
  %v289 = vadd.f32 0.0, %v288
  %v290 = vpop.f32.mrb[0].mxu0
  %291 = vdwg.mxu0
  %v292 = vadd.f32 %v286, %v238
  %v293 = vadd.f32 %v289, %v242
  %v294 = vlaneseq
  %v295 = vshrl.u32 %v294, 7
  %vm296 = vcmp.gt.s32.totalorder %v295, 0
  %v297 = vsel %vm296, 1, 0
  %v298 = vcvt.s32.f32 %v297
  %vm299 = vcmp.lt.s32.totalorder %v295, 7
  %v300 = vsel %vm299, 1, 0
  %v301 = vcvt.s32.f32 %v300
  %v302 = vld [vmem:[%s1] sm:$0xff]
  %v303 = vld [vmem:[%s1 + $0x8] sm:$0xff]
  %v304 = vld [vmem:[%s2] sm:$0xff]
  %v305 = vld [vmem:[%s2 + $0x8] sm:$0xff]
  %v306 = vpack.c.bf16 %v302, %v302
  %v307 = vpack.c.bf16 %v303, %v303
  %v308 = vpack.c.bf16 %v304, %v304
  %v309 = vpack.c.bf16 %v305, %v305
  %v310 = vrot.slane %v302, 1
  %v311 = vrot.slane %v303, 1
  %v312 = vmul.f32 %v310, %v301
  %v313 = vmul.f32 %v311, %v301
  %v314 = vpack.c.bf16 %v312, %v312
  %v315 = vpack.c.bf16 %v313, %v313
  %v316 = vrot.slane %v304, 7
  %v317 = vrot.slane %v305, 7
  %v318 = vmul.f32 %v316, %v298
  %v319 = vmul.f32 %v317, %v298
  %v320 = vpack.c.bf16 %v318, %v318
  %v321 = vpack.c.bf16 %v319, %v319
  %v322 = vpack.c.bf16 %v245, %v245
  %v323 = vpack.c.bf16 %v246, %v246
  %v324 = vpack.c.bf16 %v292, %v292
  %v325 = vpack.c.bf16 %v293, %v293
  %v326 = vrot.slane %v245, 1
  %v327 = vrot.slane %v246, 1
  %v328 = vmul.f32 %v326, %v301
  %v329 = vmul.f32 %v327, %v301
  %v330 = vpack.c.bf16 %v328, %v328
  %v331 = vpack.c.bf16 %v329, %v329
  %v332 = vrot.slane %v292, 7
  %v333 = vrot.slane %v293, 7
  %v334 = vmul.f32 %v332, %v298
  %v335 = vmul.f32 %v333, %v298
  %v336 = vpack.c.bf16 %v334, %v334
  %v337 = vpack.c.bf16 %v335, %v335
  %v338 = vld [vmem:[%s9] sm:$0xf]
  %v339 = vld [vmem:[%s9 + $0x4] sm:$0xf]
  %v340 = vld [vmem:[%s9 + $0x8] sm:$0xf]
  %v341 = vld [vmem:[%s9 + $0xc] sm:$0xf]
  %v342 = vld [vmem:[%s9 + $0x10] sm:$0xf]
  %v343 = vld [vmem:[%s9 + $0x14] sm:$0xf]
  %v344 = vld [vmem:[%s9 + $0x18] sm:$0xf]
  %v345 = vld [vmem:[%s9 + $0x1c] sm:$0xf]
  %v346 = vld [vmem:[%s9 + $0x20] sm:$0xf]
  %v347 = vld [vmem:[%s9 + $0x24] sm:$0xf]
  %v348 = vld [vmem:[%s9 + $0x28] sm:$0xf]
  %v349 = vld [vmem:[%s9 + $0x2c] sm:$0xf]
  %v350 = vld [vmem:[%s9 + $0x30] sm:$0xf]
  %v351 = vld [vmem:[%s9 + $0x34] sm:$0xf]
  %v352 = vld [vmem:[%s9 + $0x38] sm:$0xf]
  %v353 = vld [vmem:[%s9 + $0x3c] sm:$0xf]
  %v354 = vld [vmem:[%s10] sm:$0xf]
  %v355 = vld [vmem:[%s10 + $0x4] sm:$0xf]
  %v356 = vld [vmem:[%s10 + $0x8] sm:$0xf]
  %v357 = vld [vmem:[%s10 + $0xc] sm:$0xf]
  %v358 = vld [vmem:[%s10 + $0x10] sm:$0xf]
  %v359 = vld [vmem:[%s10 + $0x14] sm:$0xf]
  %v360 = vld [vmem:[%s10 + $0x18] sm:$0xf]
  %v361 = vld [vmem:[%s10 + $0x1c] sm:$0xf]
  %v362 = vld [vmem:[%s10 + $0x20] sm:$0xf]
  %v363 = vld [vmem:[%s10 + $0x24] sm:$0xf]
  %v364 = vld [vmem:[%s10 + $0x28] sm:$0xf]
  %v365 = vld [vmem:[%s10 + $0x2c] sm:$0xf]
  %v366 = vld [vmem:[%s10 + $0x30] sm:$0xf]
  %v367 = vld [vmem:[%s10 + $0x34] sm:$0xf]
  %v368 = vld [vmem:[%s10 + $0x38] sm:$0xf]
  %v369 = vld [vmem:[%s10 + $0x3c] sm:$0xf]
  %v372 = vunpack.c.l.b16 %v336
  %v373 = vunpack.c.l.b16 %v337
  %v374 = vpack.c.b16 %v373, %v372
  %v392 = vunpack.c.l.b16 %v354
  %v393 = vunpack.c.l.b16 %v355
  %v394 = vunpack.c.l.b16 %v356
  %v395 = vunpack.c.l.b16 %v357
  %v396 = vunpack.c.l.b16 %v358
  %v397 = vunpack.c.l.b16 %v359
  %v398 = vunpack.c.l.b16 %v360
  %v399 = vunpack.c.l.b16 %v361
  %v400 = vunpack.c.l.b16 %v362
  %v401 = vunpack.c.l.b16 %v363
  %v402 = vunpack.c.l.b16 %v364
  %v403 = vunpack.c.l.b16 %v365
  %v404 = vunpack.c.l.b16 %v366
  %v405 = vunpack.c.l.b16 %v367
  %v406 = vunpack.c.l.b16 %v368
  %v407 = vunpack.c.l.b16 %v369
  %v408 = vpack.c.b16 %v393, %v392
  %v409 = vpack.c.b16 %v395, %v394
  %v410 = vpack.c.b16 %v397, %v396
  %v411 = vpack.c.b16 %v399, %v398
  %v412 = vpack.c.b16 %v401, %v400
  %v413 = vpack.c.b16 %v403, %v402
  %v414 = vpack.c.b16 %v405, %v404
  %v415 = vpack.c.b16 %v407, %v406
  %424 = vmatprep.subr.bf16.mxu0 0
  %425 = vmatpush1.bf16.msra.mxu0 %v408
  %426 = vmatprep.subr.bf16.mxu0 0
  %427 = vmatpush1.bf16.msra.mxu0 %v409
  %428 = vmatprep.subr.bf16.mxu0 0
  %429 = vmatpush1.bf16.msra.mxu0 %v410
  %430 = vmatprep.subr.bf16.mxu0 0
  %431 = vmatpush1.bf16.msra.mxu0 %v411
  %432 = vmatprep.subr.bf16.mxu0 0
  %433 = vmatpush1.bf16.msra.mxu0 %v412
  %434 = vmatprep.subr.bf16.mxu0 0
  %435 = vmatpush1.bf16.msra.mxu0 %v413
  %436 = vmatprep.subr.bf16.mxu0 0
  %437 = vmatpush1.bf16.msra.mxu0 %v414
  %438 = vmatprep.subr.bf16.mxu0 0
  %439 = vmatpush1.bf16.msra.mxu0 %v415
  %440 = vmatprep.subr.bf16.mxu0 0
  %441 = vmatpush1.bf16.msra.mxu0 0
  %442 = vmatprep.subr.bf16.mxu0 0
  %443 = vmatpush1.bf16.msra.mxu0 0
  %444 = vmatprep.subr.bf16.mxu0 0
  %445 = vmatpush1.bf16.msra.mxu0 0
  %446 = vmatprep.subr.bf16.mxu0 0
  %447 = vmatpush1.bf16.msra.mxu0 0
  %448 = vmatprep.subr.bf16.mxu0 0
  %449 = vmatpush1.bf16.msra.mxu0 0
  %450 = vmatprep.subr.bf16.mxu0 0
  %451 = vmatpush1.bf16.msra.mxu0 0
  %452 = vmatprep.subr.bf16.mxu0 0
  %453 = vmatpush1.bf16.msra.mxu0 0
  %454 = vmatprep.subr.bf16.mxu0 0
  %455 = vmatpush1.bf16.msra.mxu0 0
  %456 = vmatprep.mubr.bf16.mxu0 0
  %457 = vmatmul.mubr.bf16.gmra.mrb[0].mxu0 %v374
  %v458 = vpop.f32.mrb[0].mxu0
  %v459 = vadd.f32 0.0, %v458
  %v460 = vpop.f32.mrb[0].mxu0
  %v461 = vpop.f32.mrb[0].mxu0
  %v462 = vadd.f32 0.0, %v461
  %v463 = vpop.f32.mrb[0].mxu0
  %464 = vdwg.mxu0
  %v467 = vunpack.c.l.b16 %v320
  %v468 = vunpack.c.l.b16 %v321
  %v469 = vpack.c.b16 %v468, %v467
  %v487 = vunpack.c.l.b16 %v338
  %v488 = vunpack.c.l.b16 %v339
  %v489 = vunpack.c.l.b16 %v340
  %v490 = vunpack.c.l.b16 %v341
  %v491 = vunpack.c.l.b16 %v342
  %v492 = vunpack.c.l.b16 %v343
  %v493 = vunpack.c.l.b16 %v344
  %v494 = vunpack.c.l.b16 %v345
  %v495 = vunpack.c.l.b16 %v346
  %v496 = vunpack.c.l.b16 %v347
  %v497 = vunpack.c.l.b16 %v348
  %v498 = vunpack.c.l.b16 %v349
  %v499 = vunpack.c.l.b16 %v350
  %v500 = vunpack.c.l.b16 %v351
  %v501 = vunpack.c.l.b16 %v352
  %v502 = vunpack.c.l.b16 %v353
  %v503 = vpack.c.b16 %v488, %v487
  %v504 = vpack.c.b16 %v490, %v489
  %v505 = vpack.c.b16 %v492, %v491
  %v506 = vpack.c.b16 %v494, %v493
  %v507 = vpack.c.b16 %v496, %v495
  %v508 = vpack.c.b16 %v498, %v497
  %v509 = vpack.c.b16 %v500, %v499
  %v510 = vpack.c.b16 %v502, %v501
  %519 = vmatprep.subr.bf16.mxu0 0
  %520 = vmatpush1.bf16.msra.mxu0 %v503
  %521 = vmatprep.subr.bf16.mxu0 0
  %522 = vmatpush1.bf16.msra.mxu0 %v504
  %523 = vmatprep.subr.bf16.mxu0 0
  %524 = vmatpush1.bf16.msra.mxu0 %v505
  %525 = vmatprep.subr.bf16.mxu0 0
  %526 = vmatpush1.bf16.msra.mxu0 %v506
  %527 = vmatprep.subr.bf16.mxu0 0
  %528 = vmatpush1.bf16.msra.mxu0 %v507
  %529 = vmatprep.subr.bf16.mxu0 0
  %530 = vmatpush1.bf16.msra.mxu0 %v508
  %531 = vmatprep.subr.bf16.mxu0 0
  %532 = vmatpush1.bf16.msra.mxu0 %v509
  %533 = vmatprep.subr.bf16.mxu0 0
  %534 = vmatpush1.bf16.msra.mxu0 %v510
  %535 = vmatprep.subr.bf16.mxu0 0
  %536 = vmatpush1.bf16.msra.mxu0 0
  %537 = vmatprep.subr.bf16.mxu0 0
  %538 = vmatpush1.bf16.msra.mxu0 0
  %539 = vmatprep.subr.bf16.mxu0 0
  %540 = vmatpush1.bf16.msra.mxu0 0
  %541 = vmatprep.subr.bf16.mxu0 0
  %542 = vmatpush1.bf16.msra.mxu0 0
  %543 = vmatprep.subr.bf16.mxu0 0
  %544 = vmatpush1.bf16.msra.mxu0 0
  %545 = vmatprep.subr.bf16.mxu0 0
  %546 = vmatpush1.bf16.msra.mxu0 0
  %547 = vmatprep.subr.bf16.mxu0 0
  %548 = vmatpush1.bf16.msra.mxu0 0
  %549 = vmatprep.subr.bf16.mxu0 0
  %550 = vmatpush1.bf16.msra.mxu0 0
  %551 = vmatprep.mubr.bf16.mxu0 0
  %552 = vmatmul.mubr.bf16.gmra.mrb[0].mxu0 %v469
  %v553 = vpop.f32.mrb[0].mxu0
  %v554 = vadd.f32 %v459, %v553
  %v555 = vpop.f32.mrb[0].mxu0
  %v556 = vpop.f32.mrb[0].mxu0
  %v557 = vadd.f32 %v462, %v556
  %v558 = vpop.f32.mrb[0].mxu0
  %559 = vdwg.mxu0
  %s560 = scalar_lea.vmem %s9, 64
  %v561 = vld [vmem:[%s560] sm:$0xf]
  %v562 = vld [vmem:[%s560 + $0x4] sm:$0xf]
  %v563 = vld [vmem:[%s560 + $0x8] sm:$0xf]
  %v564 = vld [vmem:[%s560 + $0xc] sm:$0xf]
  %v565 = vld [vmem:[%s560 + $0x10] sm:$0xf]
  %v566 = vld [vmem:[%s560 + $0x14] sm:$0xf]
  %v567 = vld [vmem:[%s560 + $0x18] sm:$0xf]
  %v568 = vld [vmem:[%s560 + $0x1c] sm:$0xf]
  %v569 = vld [vmem:[%s560 + $0x20] sm:$0xf]
  %v570 = vld [vmem:[%s560 + $0x24] sm:$0xf]
  %v571 = vld [vmem:[%s560 + $0x28] sm:$0xf]
  %v572 = vld [vmem:[%s560 + $0x2c] sm:$0xf]
  %v573 = vld [vmem:[%s560 + $0x30] sm:$0xf]
  %v574 = vld [vmem:[%s560 + $0x34] sm:$0xf]
  %v575 = vld [vmem:[%s560 + $0x38] sm:$0xf]
  %v576 = vld [vmem:[%s560 + $0x3c] sm:$0xf]
  %v579 = vunpack.c.l.b16 %v306
  %v580 = vunpack.c.l.b16 %v307
  %v581 = vpack.c.b16 %v580, %v579
  %v599 = vunpack.c.l.b16 %v561
  %v600 = vunpack.c.l.b16 %v562
  %v601 = vunpack.c.l.b16 %v563
  %v602 = vunpack.c.l.b16 %v564
  %v603 = vunpack.c.l.b16 %v565
  %v604 = vunpack.c.l.b16 %v566
  %v605 = vunpack.c.l.b16 %v567
  %v606 = vunpack.c.l.b16 %v568
  %v607 = vunpack.c.l.b16 %v569
  %v608 = vunpack.c.l.b16 %v570
  %v609 = vunpack.c.l.b16 %v571
  %v610 = vunpack.c.l.b16 %v572
  %v611 = vunpack.c.l.b16 %v573
  %v612 = vunpack.c.l.b16 %v574
  %v613 = vunpack.c.l.b16 %v575
  %v614 = vunpack.c.l.b16 %v576
  %v615 = vpack.c.b16 %v600, %v599
  %v616 = vpack.c.b16 %v602, %v601
  %v617 = vpack.c.b16 %v604, %v603
  %v618 = vpack.c.b16 %v606, %v605
  %v619 = vpack.c.b16 %v608, %v607
  %v620 = vpack.c.b16 %v610, %v609
  %v621 = vpack.c.b16 %v612, %v611
  %v622 = vpack.c.b16 %v614, %v613
  %631 = vmatprep.subr.bf16.mxu0 0
  %632 = vmatpush1.bf16.msra.mxu0 %v615
  %633 = vmatprep.subr.bf16.mxu0 0
  %634 = vmatpush1.bf16.msra.mxu0 %v616
  %635 = vmatprep.subr.bf16.mxu0 0
  %636 = vmatpush1.bf16.msra.mxu0 %v617
  %637 = vmatprep.subr.bf16.mxu0 0
  %638 = vmatpush1.bf16.msra.mxu0 %v618
  %639 = vmatprep.subr.bf16.mxu0 0
  %640 = vmatpush1.bf16.msra.mxu0 %v619
  %641 = vmatprep.subr.bf16.mxu0 0
  %642 = vmatpush1.bf16.msra.mxu0 %v620
  %643 = vmatprep.subr.bf16.mxu0 0
  %644 = vmatpush1.bf16.msra.mxu0 %v621
  %645 = vmatprep.subr.bf16.mxu0 0
  %646 = vmatpush1.bf16.msra.mxu0 %v622
  %647 = vmatprep.subr.bf16.mxu0 0
  %648 = vmatpush1.bf16.msra.mxu0 0
  %649 = vmatprep.subr.bf16.mxu0 0
  %650 = vmatpush1.bf16.msra.mxu0 0
  %651 = vmatprep.subr.bf16.mxu0 0
  %652 = vmatpush1.bf16.msra.mxu0 0
  %653 = vmatprep.subr.bf16.mxu0 0
  %654 = vmatpush1.bf16.msra.mxu0 0
  %655 = vmatprep.subr.bf16.mxu0 0
  %656 = vmatpush1.bf16.msra.mxu0 0
  %657 = vmatprep.subr.bf16.mxu0 0
  %658 = vmatpush1.bf16.msra.mxu0 0
  %659 = vmatprep.subr.bf16.mxu0 0
  %660 = vmatpush1.bf16.msra.mxu0 0
  %661 = vmatprep.subr.bf16.mxu0 0
  %662 = vmatpush1.bf16.msra.mxu0 0
  %663 = vmatprep.mubr.bf16.mxu0 0
  %664 = vmatmul.mubr.bf16.gmra.mrb[0].mxu0 %v581
  %v665 = vpop.f32.mrb[0].mxu0
  %v666 = vadd.f32 0.0, %v665
  %v667 = vpop.f32.mrb[0].mxu0
  %v668 = vpop.f32.mrb[0].mxu0
  %v669 = vadd.f32 0.0, %v668
  %v670 = vpop.f32.mrb[0].mxu0
  %671 = vdwg.mxu0
  %v672 = vadd.f32 %v554, %v666
  %v673 = vadd.f32 %v557, %v669
  %s674 = scalar_lea.vmem %s10, 64
  %v675 = vld [vmem:[%s674] sm:$0xf]
  %v676 = vld [vmem:[%s674 + $0x4] sm:$0xf]
  %v677 = vld [vmem:[%s674 + $0x8] sm:$0xf]
  %v678 = vld [vmem:[%s674 + $0xc] sm:$0xf]
  %v679 = vld [vmem:[%s674 + $0x10] sm:$0xf]
  %v680 = vld [vmem:[%s674 + $0x14] sm:$0xf]
  %v681 = vld [vmem:[%s674 + $0x18] sm:$0xf]
  %v682 = vld [vmem:[%s674 + $0x1c] sm:$0xf]
  %v683 = vld [vmem:[%s674 + $0x20] sm:$0xf]
  %v684 = vld [vmem:[%s674 + $0x24] sm:$0xf]
  %v685 = vld [vmem:[%s674 + $0x28] sm:$0xf]
  %v686 = vld [vmem:[%s674 + $0x2c] sm:$0xf]
  %v687 = vld [vmem:[%s674 + $0x30] sm:$0xf]
  %v688 = vld [vmem:[%s674 + $0x34] sm:$0xf]
  %v689 = vld [vmem:[%s674 + $0x38] sm:$0xf]
  %v690 = vld [vmem:[%s674 + $0x3c] sm:$0xf]
  %v693 = vunpack.c.l.b16 %v322
  %v694 = vunpack.c.l.b16 %v323
  %v695 = vpack.c.b16 %v694, %v693
  %v713 = vunpack.c.l.b16 %v675
  %v714 = vunpack.c.l.b16 %v676
  %v715 = vunpack.c.l.b16 %v677
  %v716 = vunpack.c.l.b16 %v678
  %v717 = vunpack.c.l.b16 %v679
  %v718 = vunpack.c.l.b16 %v680
  %v719 = vunpack.c.l.b16 %v681
  %v720 = vunpack.c.l.b16 %v682
  %v721 = vunpack.c.l.b16 %v683
  %v722 = vunpack.c.l.b16 %v684
  %v723 = vunpack.c.l.b16 %v685
  %v724 = vunpack.c.l.b16 %v686
  %v725 = vunpack.c.l.b16 %v687
  %v726 = vunpack.c.l.b16 %v688
  %v727 = vunpack.c.l.b16 %v689
  %v728 = vunpack.c.l.b16 %v690
  %v729 = vpack.c.b16 %v714, %v713
  %v730 = vpack.c.b16 %v716, %v715
  %v731 = vpack.c.b16 %v718, %v717
  %v732 = vpack.c.b16 %v720, %v719
  %v733 = vpack.c.b16 %v722, %v721
  %v734 = vpack.c.b16 %v724, %v723
  %v735 = vpack.c.b16 %v726, %v725
  %v736 = vpack.c.b16 %v728, %v727
  %745 = vmatprep.subr.bf16.mxu0 0
  %746 = vmatpush1.bf16.msra.mxu0 %v729
  %747 = vmatprep.subr.bf16.mxu0 0
  %748 = vmatpush1.bf16.msra.mxu0 %v730
  %749 = vmatprep.subr.bf16.mxu0 0
  %750 = vmatpush1.bf16.msra.mxu0 %v731
  %751 = vmatprep.subr.bf16.mxu0 0
  %752 = vmatpush1.bf16.msra.mxu0 %v732
  %753 = vmatprep.subr.bf16.mxu0 0
  %754 = vmatpush1.bf16.msra.mxu0 %v733
  %755 = vmatprep.subr.bf16.mxu0 0
  %756 = vmatpush1.bf16.msra.mxu0 %v734
  %757 = vmatprep.subr.bf16.mxu0 0
  %758 = vmatpush1.bf16.msra.mxu0 %v735
  %759 = vmatprep.subr.bf16.mxu0 0
  %760 = vmatpush1.bf16.msra.mxu0 %v736
  %761 = vmatprep.subr.bf16.mxu0 0
  %762 = vmatpush1.bf16.msra.mxu0 0
  %763 = vmatprep.subr.bf16.mxu0 0
  %764 = vmatpush1.bf16.msra.mxu0 0
  %765 = vmatprep.subr.bf16.mxu0 0
  %766 = vmatpush1.bf16.msra.mxu0 0
  %767 = vmatprep.subr.bf16.mxu0 0
  %768 = vmatpush1.bf16.msra.mxu0 0
  %769 = vmatprep.subr.bf16.mxu0 0
  %770 = vmatpush1.bf16.msra.mxu0 0
  %771 = vmatprep.subr.bf16.mxu0 0
  %772 = vmatpush1.bf16.msra.mxu0 0
  %773 = vmatprep.subr.bf16.mxu0 0
  %774 = vmatpush1.bf16.msra.mxu0 0
  %775 = vmatprep.subr.bf16.mxu0 0
  %776 = vmatpush1.bf16.msra.mxu0 0
  %777 = vmatprep.mubr.bf16.mxu0 0
  %778 = vmatmul.mubr.bf16.gmra.mrb[0].mxu0 %v695
  %v779 = vpop.f32.mrb[0].mxu0
  %v780 = vadd.f32 0.0, %v779
  %v781 = vpop.f32.mrb[0].mxu0
  %v782 = vpop.f32.mrb[0].mxu0
  %v783 = vadd.f32 0.0, %v782
  %v784 = vpop.f32.mrb[0].mxu0
  %785 = vdwg.mxu0
  %v786 = vadd.f32 %v672, %v780
  %v787 = vadd.f32 %v673, %v783
  %s788 = scalar_lea.vmem %s9, 128
  %v789 = vld [vmem:[%s788] sm:$0xf]
  %v790 = vld [vmem:[%s788 + $0x4] sm:$0xf]
  %v791 = vld [vmem:[%s788 + $0x8] sm:$0xf]
  %v792 = vld [vmem:[%s788 + $0xc] sm:$0xf]
  %v793 = vld [vmem:[%s788 + $0x10] sm:$0xf]
  %v794 = vld [vmem:[%s788 + $0x14] sm:$0xf]
  %v795 = vld [vmem:[%s788 + $0x18] sm:$0xf]
  %v796 = vld [vmem:[%s788 + $0x1c] sm:$0xf]
  %v797 = vld [vmem:[%s788 + $0x20] sm:$0xf]
  %v798 = vld [vmem:[%s788 + $0x24] sm:$0xf]
  %v799 = vld [vmem:[%s788 + $0x28] sm:$0xf]
  %v800 = vld [vmem:[%s788 + $0x2c] sm:$0xf]
  %v801 = vld [vmem:[%s788 + $0x30] sm:$0xf]
  %v802 = vld [vmem:[%s788 + $0x34] sm:$0xf]
  %v803 = vld [vmem:[%s788 + $0x38] sm:$0xf]
  %v804 = vld [vmem:[%s788 + $0x3c] sm:$0xf]
  %v807 = vunpack.c.l.b16 %v308
  %v808 = vunpack.c.l.b16 %v309
  %v809 = vpack.c.b16 %v808, %v807
  %v827 = vunpack.c.l.b16 %v789
  %v828 = vunpack.c.l.b16 %v790
  %v829 = vunpack.c.l.b16 %v791
  %v830 = vunpack.c.l.b16 %v792
  %v831 = vunpack.c.l.b16 %v793
  %v832 = vunpack.c.l.b16 %v794
  %v833 = vunpack.c.l.b16 %v795
  %v834 = vunpack.c.l.b16 %v796
  %v835 = vunpack.c.l.b16 %v797
  %v836 = vunpack.c.l.b16 %v798
  %v837 = vunpack.c.l.b16 %v799
  %v838 = vunpack.c.l.b16 %v800
  %v839 = vunpack.c.l.b16 %v801
  %v840 = vunpack.c.l.b16 %v802
  %v841 = vunpack.c.l.b16 %v803
  %v842 = vunpack.c.l.b16 %v804
  %v843 = vpack.c.b16 %v828, %v827
  %v844 = vpack.c.b16 %v830, %v829
  %v845 = vpack.c.b16 %v832, %v831
  %v846 = vpack.c.b16 %v834, %v833
  %v847 = vpack.c.b16 %v836, %v835
  %v848 = vpack.c.b16 %v838, %v837
  %v849 = vpack.c.b16 %v840, %v839
  %v850 = vpack.c.b16 %v842, %v841
  %859 = vmatprep.subr.bf16.mxu0 0
  %860 = vmatpush1.bf16.msra.mxu0 %v843
  %861 = vmatprep.subr.bf16.mxu0 0
  %862 = vmatpush1.bf16.msra.mxu0 %v844
  %863 = vmatprep.subr.bf16.mxu0 0
  %864 = vmatpush1.bf16.msra.mxu0 %v845
  %865 = vmatprep.subr.bf16.mxu0 0
  %866 = vmatpush1.bf16.msra.mxu0 %v846
  %867 = vmatprep.subr.bf16.mxu0 0
  %868 = vmatpush1.bf16.msra.mxu0 %v847
  %869 = vmatprep.subr.bf16.mxu0 0
  %870 = vmatpush1.bf16.msra.mxu0 %v848
  %871 = vmatprep.subr.bf16.mxu0 0
  %872 = vmatpush1.bf16.msra.mxu0 %v849
  %873 = vmatprep.subr.bf16.mxu0 0
  %874 = vmatpush1.bf16.msra.mxu0 %v850
  %875 = vmatprep.subr.bf16.mxu0 0
  %876 = vmatpush1.bf16.msra.mxu0 0
  %877 = vmatprep.subr.bf16.mxu0 0
  %878 = vmatpush1.bf16.msra.mxu0 0
  %879 = vmatprep.subr.bf16.mxu0 0
  %880 = vmatpush1.bf16.msra.mxu0 0
  %881 = vmatprep.subr.bf16.mxu0 0
  %882 = vmatpush1.bf16.msra.mxu0 0
  %883 = vmatprep.subr.bf16.mxu0 0
  %884 = vmatpush1.bf16.msra.mxu0 0
  %885 = vmatprep.subr.bf16.mxu0 0
  %886 = vmatpush1.bf16.msra.mxu0 0
  %887 = vmatprep.subr.bf16.mxu0 0
  %888 = vmatpush1.bf16.msra.mxu0 0
  %889 = vmatprep.subr.bf16.mxu0 0
  %890 = vmatpush1.bf16.msra.mxu0 0
  %891 = vmatprep.mubr.bf16.mxu0 0
  %892 = vmatmul.mubr.bf16.gmra.mrb[0].mxu0 %v809
  %v893 = vpop.f32.mrb[0].mxu0
  %v894 = vadd.f32 0.0, %v893
  %v895 = vpop.f32.mrb[0].mxu0
  %v896 = vpop.f32.mrb[0].mxu0
  %v897 = vadd.f32 0.0, %v896
  %v898 = vpop.f32.mrb[0].mxu0
  %899 = vdwg.mxu0
  %v900 = vadd.f32 %v786, %v894
  %v901 = vadd.f32 %v787, %v897
  %s902 = scalar_lea.vmem %s10, 128
  %v903 = vld [vmem:[%s902] sm:$0xf]
  %v904 = vld [vmem:[%s902 + $0x4] sm:$0xf]
  %v905 = vld [vmem:[%s902 + $0x8] sm:$0xf]
  %v906 = vld [vmem:[%s902 + $0xc] sm:$0xf]
  %v907 = vld [vmem:[%s902 + $0x10] sm:$0xf]
  %v908 = vld [vmem:[%s902 + $0x14] sm:$0xf]
  %v909 = vld [vmem:[%s902 + $0x18] sm:$0xf]
  %v910 = vld [vmem:[%s902 + $0x1c] sm:$0xf]
  %v911 = vld [vmem:[%s902 + $0x20] sm:$0xf]
  %v912 = vld [vmem:[%s902 + $0x24] sm:$0xf]
  %v913 = vld [vmem:[%s902 + $0x28] sm:$0xf]
  %v914 = vld [vmem:[%s902 + $0x2c] sm:$0xf]
  %v915 = vld [vmem:[%s902 + $0x30] sm:$0xf]
  %v916 = vld [vmem:[%s902 + $0x34] sm:$0xf]
  %v917 = vld [vmem:[%s902 + $0x38] sm:$0xf]
  %v918 = vld [vmem:[%s902 + $0x3c] sm:$0xf]
  %v921 = vunpack.c.l.b16 %v324
  %v922 = vunpack.c.l.b16 %v325
  %v923 = vpack.c.b16 %v922, %v921
  %v941 = vunpack.c.l.b16 %v903
  %v942 = vunpack.c.l.b16 %v904
  %v943 = vunpack.c.l.b16 %v905
  %v944 = vunpack.c.l.b16 %v906
  %v945 = vunpack.c.l.b16 %v907
  %v946 = vunpack.c.l.b16 %v908
  %v947 = vunpack.c.l.b16 %v909
  %v948 = vunpack.c.l.b16 %v910
  %v949 = vunpack.c.l.b16 %v911
  %v950 = vunpack.c.l.b16 %v912
  %v951 = vunpack.c.l.b16 %v913
  %v952 = vunpack.c.l.b16 %v914
  %v953 = vunpack.c.l.b16 %v915
  %v954 = vunpack.c.l.b16 %v916
  %v955 = vunpack.c.l.b16 %v917
  %v956 = vunpack.c.l.b16 %v918
  %v957 = vpack.c.b16 %v942, %v941
  %v958 = vpack.c.b16 %v944, %v943
  %v959 = vpack.c.b16 %v946, %v945
  %v960 = vpack.c.b16 %v948, %v947
  %v961 = vpack.c.b16 %v950, %v949
  %v962 = vpack.c.b16 %v952, %v951
  %v963 = vpack.c.b16 %v954, %v953
  %v964 = vpack.c.b16 %v956, %v955
  %973 = vmatprep.subr.bf16.mxu0 0
  %974 = vmatpush1.bf16.msra.mxu0 %v957
  %975 = vmatprep.subr.bf16.mxu0 0
  %976 = vmatpush1.bf16.msra.mxu0 %v958
  %977 = vmatprep.subr.bf16.mxu0 0
  %978 = vmatpush1.bf16.msra.mxu0 %v959
  %979 = vmatprep.subr.bf16.mxu0 0
  %980 = vmatpush1.bf16.msra.mxu0 %v960
  %981 = vmatprep.subr.bf16.mxu0 0
  %982 = vmatpush1.bf16.msra.mxu0 %v961
  %983 = vmatprep.subr.bf16.mxu0 0
  %984 = vmatpush1.bf16.msra.mxu0 %v962
  %985 = vmatprep.subr.bf16.mxu0 0
  %986 = vmatpush1.bf16.msra.mxu0 %v963
  %987 = vmatprep.subr.bf16.mxu0 0
  %988 = vmatpush1.bf16.msra.mxu0 %v964
  %989 = vmatprep.subr.bf16.mxu0 0
  %990 = vmatpush1.bf16.msra.mxu0 0
  %991 = vmatprep.subr.bf16.mxu0 0
  %992 = vmatpush1.bf16.msra.mxu0 0
  %993 = vmatprep.subr.bf16.mxu0 0
  %994 = vmatpush1.bf16.msra.mxu0 0
  %995 = vmatprep.subr.bf16.mxu0 0
  %996 = vmatpush1.bf16.msra.mxu0 0
  %997 = vmatprep.subr.bf16.mxu0 0
  %998 = vmatpush1.bf16.msra.mxu0 0
  %999 = vmatprep.subr.bf16.mxu0 0
  %1000 = vmatpush1.bf16.msra.mxu0 0
  %1001 = vmatprep.subr.bf16.mxu0 0
  %1002 = vmatpush1.bf16.msra.mxu0 0
  %1003 = vmatprep.subr.bf16.mxu0 0
  %1004 = vmatpush1.bf16.msra.mxu0 0
  %1005 = vmatprep.mubr.bf16.mxu0 0
  %1006 = vmatmul.mubr.bf16.gmra.mrb[0].mxu0 %v923
  %v1007 = vpop.f32.mrb[0].mxu0
  %v1008 = vadd.f32 0.0, %v1007
  %v1009 = vpop.f32.mrb[0].mxu0
  %v1010 = vpop.f32.mrb[0].mxu0
  %v1011 = vadd.f32 0.0, %v1010
  %v1012 = vpop.f32.mrb[0].mxu0
  %1013 = vdwg.mxu0
  %v1014 = vadd.f32 %v900, %v1008
  %v1015 = vadd.f32 %v901, %v1011
  %1016 = vmatprep.subr.bf16.mxu0 0
  %1017 = vmatpush1.bf16.msra.mxu0 %v408
  %1018 = vmatprep.subr.bf16.mxu0 0
  %1019 = vmatpush1.bf16.msra.mxu0 %v409
  %1020 = vmatprep.subr.bf16.mxu0 0
  %1021 = vmatpush1.bf16.msra.mxu0 %v410
  %1022 = vmatprep.subr.bf16.mxu0 0
  %1023 = vmatpush1.bf16.msra.mxu0 %v411
  %1024 = vmatprep.subr.bf16.mxu0 0
  %1025 = vmatpush1.bf16.msra.mxu0 %v412
  %1026 = vmatprep.subr.bf16.mxu0 0
  %1027 = vmatpush1.bf16.msra.mxu0 %v413
  %1028 = vmatprep.subr.bf16.mxu0 0
  %1029 = vmatpush1.bf16.msra.mxu0 %v414
  %1030 = vmatprep.subr.bf16.mxu0 0
  %1031 = vmatpush1.bf16.msra.mxu0 %v415
  %1032 = vmatprep.subr.bf16.mxu0 0
  %1033 = vmatpush1.bf16.msra.mxu0 0
  %1034 = vmatprep.subr.bf16.mxu0 0
  %1035 = vmatpush1.bf16.msra.mxu0 0
  %1036 = vmatprep.subr.bf16.mxu0 0
  %1037 = vmatpush1.bf16.msra.mxu0 0
  %1038 = vmatprep.subr.bf16.mxu0 0
  %1039 = vmatpush1.bf16.msra.mxu0 0
  %1040 = vmatprep.subr.bf16.mxu0 0
  %1041 = vmatpush1.bf16.msra.mxu0 0
  %1042 = vmatprep.subr.bf16.mxu0 0
  %1043 = vmatpush1.bf16.msra.mxu0 0
  %1044 = vmatprep.subr.bf16.mxu0 0
  %1045 = vmatpush1.bf16.msra.mxu0 0
  %1046 = vmatprep.subr.bf16.mxu0 0
  %1047 = vmatpush1.bf16.msra.mxu0 0
  %1048 = vmatprep.mubr.bf16.mxu0 0
  %1049 = vmatmul.mubr.bf16.gmra.mrb[0].mxu0 %v695
  %v1050 = vpop.f32.mrb[0].mxu0
  %v1051 = vadd.f32 0.0, %v1050
  %v1052 = vpop.f32.mrb[0].mxu0
  %v1053 = vpop.f32.mrb[0].mxu0
  %v1054 = vadd.f32 0.0, %v1053
  %v1055 = vpop.f32.mrb[0].mxu0
  %1056 = vdwg.mxu0
  %1057 = vmatprep.subr.bf16.mxu0 0
  %1058 = vmatpush1.bf16.msra.mxu0 %v503
  %1059 = vmatprep.subr.bf16.mxu0 0
  %1060 = vmatpush1.bf16.msra.mxu0 %v504
  %1061 = vmatprep.subr.bf16.mxu0 0
  %1062 = vmatpush1.bf16.msra.mxu0 %v505
  %1063 = vmatprep.subr.bf16.mxu0 0
  %1064 = vmatpush1.bf16.msra.mxu0 %v506
  %1065 = vmatprep.subr.bf16.mxu0 0
  %1066 = vmatpush1.bf16.msra.mxu0 %v507
  %1067 = vmatprep.subr.bf16.mxu0 0
  %1068 = vmatpush1.bf16.msra.mxu0 %v508
  %1069 = vmatprep.subr.bf16.mxu0 0
  %1070 = vmatpush1.bf16.msra.mxu0 %v509
  %1071 = vmatprep.subr.bf16.mxu0 0
  %1072 = vmatpush1.bf16.msra.mxu0 %v510
  %1073 = vmatprep.subr.bf16.mxu0 0
  %1074 = vmatpush1.bf16.msra.mxu0 0
  %1075 = vmatprep.subr.bf16.mxu0 0
  %1076 = vmatpush1.bf16.msra.mxu0 0
  %1077 = vmatprep.subr.bf16.mxu0 0
  %1078 = vmatpush1.bf16.msra.mxu0 0
  %1079 = vmatprep.subr.bf16.mxu0 0
  %1080 = vmatpush1.bf16.msra.mxu0 0
  %1081 = vmatprep.subr.bf16.mxu0 0
  %1082 = vmatpush1.bf16.msra.mxu0 0
  %1083 = vmatprep.subr.bf16.mxu0 0
  %1084 = vmatpush1.bf16.msra.mxu0 0
  %1085 = vmatprep.subr.bf16.mxu0 0
  %1086 = vmatpush1.bf16.msra.mxu0 0
  %1087 = vmatprep.subr.bf16.mxu0 0
  %1088 = vmatpush1.bf16.msra.mxu0 0
  %1089 = vmatprep.mubr.bf16.mxu0 0
  %1090 = vmatmul.mubr.bf16.gmra.mrb[0].mxu0 %v581
  %v1091 = vpop.f32.mrb[0].mxu0
  %v1092 = vadd.f32 %v1051, %v1091
  %v1093 = vpop.f32.mrb[0].mxu0
  %v1094 = vpop.f32.mrb[0].mxu0
  %v1095 = vadd.f32 %v1054, %v1094
  %v1096 = vpop.f32.mrb[0].mxu0
  %1097 = vdwg.mxu0
  %1098 = vmatprep.subr.bf16.mxu0 0
  %1099 = vmatpush1.bf16.msra.mxu0 %v615
  %1100 = vmatprep.subr.bf16.mxu0 0
  %1101 = vmatpush1.bf16.msra.mxu0 %v616
  %1102 = vmatprep.subr.bf16.mxu0 0
  %1103 = vmatpush1.bf16.msra.mxu0 %v617
  %1104 = vmatprep.subr.bf16.mxu0 0
  %1105 = vmatpush1.bf16.msra.mxu0 %v618
  %1106 = vmatprep.subr.bf16.mxu0 0
  %1107 = vmatpush1.bf16.msra.mxu0 %v619
  %1108 = vmatprep.subr.bf16.mxu0 0
  %1109 = vmatpush1.bf16.msra.mxu0 %v620
  %1110 = vmatprep.subr.bf16.mxu0 0
  %1111 = vmatpush1.bf16.msra.mxu0 %v621
  %1112 = vmatprep.subr.bf16.mxu0 0
  %1113 = vmatpush1.bf16.msra.mxu0 %v622
  %1114 = vmatprep.subr.bf16.mxu0 0
  %1115 = vmatpush1.bf16.msra.mxu0 0
  %1116 = vmatprep.subr.bf16.mxu0 0
  %1117 = vmatpush1.bf16.msra.mxu0 0
  %1118 = vmatprep.subr.bf16.mxu0 0
  %1119 = vmatpush1.bf16.msra.mxu0 0
  %1120 = vmatprep.subr.bf16.mxu0 0
  %1121 = vmatpush1.bf16.msra.mxu0 0
  %1122 = vmatprep.subr.bf16.mxu0 0
  %1123 = vmatpush1.bf16.msra.mxu0 0
  %1124 = vmatprep.subr.bf16.mxu0 0
  %1125 = vmatpush1.bf16.msra.mxu0 0
  %1126 = vmatprep.subr.bf16.mxu0 0
  %1127 = vmatpush1.bf16.msra.mxu0 0
  %1128 = vmatprep.subr.bf16.mxu0 0
  %1129 = vmatpush1.bf16.msra.mxu0 0
  %1130 = vmatprep.mubr.bf16.mxu0 0
  %1131 = vmatmul.mubr.bf16.gmra.mrb[0].mxu0 %v809
  %v1132 = vpop.f32.mrb[0].mxu0
  %v1133 = vadd.f32 0.0, %v1132
  %v1134 = vpop.f32.mrb[0].mxu0
  %v1135 = vpop.f32.mrb[0].mxu0
  %v1136 = vadd.f32 0.0, %v1135
  %v1137 = vpop.f32.mrb[0].mxu0
  %1138 = vdwg.mxu0
  %v1139 = vadd.f32 %v1092, %v1133
  %v1140 = vadd.f32 %v1095, %v1136
  %1141 = vmatprep.subr.bf16.mxu0 0
  %1142 = vmatpush1.bf16.msra.mxu0 %v729
  %1143 = vmatprep.subr.bf16.mxu0 0
  %1144 = vmatpush1.bf16.msra.mxu0 %v730
  %1145 = vmatprep.subr.bf16.mxu0 0
  %1146 = vmatpush1.bf16.msra.mxu0 %v731
  %1147 = vmatprep.subr.bf16.mxu0 0
  %1148 = vmatpush1.bf16.msra.mxu0 %v732
  %1149 = vmatprep.subr.bf16.mxu0 0
  %1150 = vmatpush1.bf16.msra.mxu0 %v733
  %1151 = vmatprep.subr.bf16.mxu0 0
  %1152 = vmatpush1.bf16.msra.mxu0 %v734
  %1153 = vmatprep.subr.bf16.mxu0 0
  %1154 = vmatpush1.bf16.msra.mxu0 %v735
  %1155 = vmatprep.subr.bf16.mxu0 0
  %1156 = vmatpush1.bf16.msra.mxu0 %v736
  %1157 = vmatprep.subr.bf16.mxu0 0
  %1158 = vmatpush1.bf16.msra.mxu0 0
  %1159 = vmatprep.subr.bf16.mxu0 0
  %1160 = vmatpush1.bf16.msra.mxu0 0
  %1161 = vmatprep.subr.bf16.mxu0 0
  %1162 = vmatpush1.bf16.msra.mxu0 0
  %1163 = vmatprep.subr.bf16.mxu0 0
  %1164 = vmatpush1.bf16.msra.mxu0 0
  %1165 = vmatprep.subr.bf16.mxu0 0
  %1166 = vmatpush1.bf16.msra.mxu0 0
  %1167 = vmatprep.subr.bf16.mxu0 0
  %1168 = vmatpush1.bf16.msra.mxu0 0
  %1169 = vmatprep.subr.bf16.mxu0 0
  %1170 = vmatpush1.bf16.msra.mxu0 0
  %1171 = vmatprep.subr.bf16.mxu0 0
  %1172 = vmatpush1.bf16.msra.mxu0 0
  %1173 = vmatprep.mubr.bf16.mxu0 0
  %1174 = vmatmul.mubr.bf16.gmra.mrb[0].mxu0 %v923
  %v1175 = vpop.f32.mrb[0].mxu0
  %v1176 = vadd.f32 0.0, %v1175
  %v1177 = vpop.f32.mrb[0].mxu0
  %v1178 = vpop.f32.mrb[0].mxu0
  %v1179 = vadd.f32 0.0, %v1178
  %v1180 = vpop.f32.mrb[0].mxu0
  %1181 = vdwg.mxu0
  %v1182 = vadd.f32 %v1139, %v1176
  %v1183 = vadd.f32 %v1140, %v1179
  %v1186 = vunpack.c.l.b16 %v314
  %v1187 = vunpack.c.l.b16 %v315
  %v1188 = vpack.c.b16 %v1187, %v1186
  %1190 = vmatprep.subr.bf16.mxu0 0
  %1191 = vmatpush1.bf16.msra.mxu0 %v843
  %1192 = vmatprep.subr.bf16.mxu0 0
  %1193 = vmatpush1.bf16.msra.mxu0 %v844
  %1194 = vmatprep.subr.bf16.mxu0 0
  %1195 = vmatpush1.bf16.msra.mxu0 %v845
  %1196 = vmatprep.subr.bf16.mxu0 0
  %1197 = vmatpush1.bf16.msra.mxu0 %v846
  %1198 = vmatprep.subr.bf16.mxu0 0
  %1199 = vmatpush1.bf16.msra.mxu0 %v847
  %1200 = vmatprep.subr.bf16.mxu0 0
  %1201 = vmatpush1.bf16.msra.mxu0 %v848
  %1202 = vmatprep.subr.bf16.mxu0 0
  %1203 = vmatpush1.bf16.msra.mxu0 %v849
  %1204 = vmatprep.subr.bf16.mxu0 0
  %1205 = vmatpush1.bf16.msra.mxu0 %v850
  %1206 = vmatprep.subr.bf16.mxu0 0
  %1207 = vmatpush1.bf16.msra.mxu0 0
  %1208 = vmatprep.subr.bf16.mxu0 0
  %1209 = vmatpush1.bf16.msra.mxu0 0
  %1210 = vmatprep.subr.bf16.mxu0 0
  %1211 = vmatpush1.bf16.msra.mxu0 0
  %1212 = vmatprep.subr.bf16.mxu0 0
  %1213 = vmatpush1.bf16.msra.mxu0 0
  %1214 = vmatprep.subr.bf16.mxu0 0
  %1215 = vmatpush1.bf16.msra.mxu0 0
  %1216 = vmatprep.subr.bf16.mxu0 0
  %1217 = vmatpush1.bf16.msra.mxu0 0
  %1218 = vmatprep.subr.bf16.mxu0 0
  %1219 = vmatpush1.bf16.msra.mxu0 0
  %1220 = vmatprep.subr.bf16.mxu0 0
  %1221 = vmatpush1.bf16.msra.mxu0 0
  %1222 = vmatprep.mubr.bf16.mxu0 0
  %1223 = vmatmul.mubr.bf16.gmra.mrb[0].mxu0 %v1188
  %v1224 = vpop.f32.mrb[0].mxu0
  %v1225 = vadd.f32 0.0, %v1224
  %v1226 = vpop.f32.mrb[0].mxu0
  %v1227 = vpop.f32.mrb[0].mxu0
  %v1228 = vadd.f32 0.0, %v1227
  %v1229 = vpop.f32.mrb[0].mxu0
  %1230 = vdwg.mxu0
  %v1231 = vadd.f32 %v1182, %v1225
  %v1232 = vadd.f32 %v1183, %v1228
  %v1235 = vunpack.c.l.b16 %v330
  %v1236 = vunpack.c.l.b16 %v331
  %v1237 = vpack.c.b16 %v1236, %v1235
  %1239 = vmatprep.subr.bf16.mxu0 0
  %1240 = vmatpush1.bf16.msra.mxu0 %v957
  %1241 = vmatprep.subr.bf16.mxu0 0
  %1242 = vmatpush1.bf16.msra.mxu0 %v958
  %1243 = vmatprep.subr.bf16.mxu0 0
  %1244 = vmatpush1.bf16.msra.mxu0 %v959
  %1245 = vmatprep.subr.bf16.mxu0 0
  %1246 = vmatpush1.bf16.msra.mxu0 %v960
  %1247 = vmatprep.subr.bf16.mxu0 0
  %1248 = vmatpush1.bf16.msra.mxu0 %v961
  %1249 = vmatprep.subr.bf16.mxu0 0
  %1250 = vmatpush1.bf16.msra.mxu0 %v962
  %1251 = vmatprep.subr.bf16.mxu0 0
  %1252 = vmatpush1.bf16.msra.mxu0 %v963
  %1253 = vmatprep.subr.bf16.mxu0 0
  %1254 = vmatpush1.bf16.msra.mxu0 %v964
  %1255 = vmatprep.subr.bf16.mxu0 0
  %1256 = vmatpush1.bf16.msra.mxu0 0
  %1257 = vmatprep.subr.bf16.mxu0 0
  %1258 = vmatpush1.bf16.msra.mxu0 0
  %1259 = vmatprep.subr.bf16.mxu0 0
  %1260 = vmatpush1.bf16.msra.mxu0 0
  %1261 = vmatprep.subr.bf16.mxu0 0
  %1262 = vmatpush1.bf16.msra.mxu0 0
  %1263 = vmatprep.subr.bf16.mxu0 0
  %1264 = vmatpush1.bf16.msra.mxu0 0
  %1265 = vmatprep.subr.bf16.mxu0 0
  %1266 = vmatpush1.bf16.msra.mxu0 0
  %1267 = vmatprep.subr.bf16.mxu0 0
  %1268 = vmatpush1.bf16.msra.mxu0 0
  %1269 = vmatprep.subr.bf16.mxu0 0
  %1270 = vmatpush1.bf16.msra.mxu0 0
  %1271 = vmatprep.mubr.bf16.mxu0 0
  %1272 = vmatmul.mubr.bf16.gmra.mrb[0].mxu0 %v1237
  %v1273 = vpop.f32.mrb[0].mxu0
  %v1274 = vadd.f32 0.0, %v1273
  %v1275 = vpop.f32.mrb[0].mxu0
  %v1276 = vpop.f32.mrb[0].mxu0
  %v1277 = vadd.f32 0.0, %v1276
  %v1278 = vpop.f32.mrb[0].mxu0
  %1279 = vdwg.mxu0
  %v1280 = vadd.f32 %v1231, %v1274
  %v1281 = vadd.f32 %v1232, %v1277
  %v1282 = vld [vmem:[%s11] sm:$0x1]
  %v1283 = vld [vmem:[%s12] sm:$0x1]
  %v1284 = vadd.f32 %v1014, %v1015
  %v1285 = vrot.slane %v1284, 4
  %v1286 = vadd.f32 %v1284, %v1285
  %v1287 = vrot.slane %v1286, 2
  %v1288 = vadd.f32 %v1286, %v1287
  %v1289 = vrot.slane %v1288, 1
  %v1290 = vadd.f32 %v1288, %v1289
  %v1291 = vadd.f32 %v1280, %v1281
  %v1292 = vrot.slane %v1291, 4
  %v1293 = vadd.f32 %v1291, %v1292
  %v1294 = vrot.slane %v1293, 2
  %v1295 = vadd.f32 %v1293, %v1294
  %v1296 = vrot.slane %v1295, 1
  %v1297 = vadd.f32 %v1295, %v1296
  %v1298 = vadd.f32 %v1290, %v1297
  %v1299 = vmul.f32 %v1014, %v1014
  %v1300 = vmul.f32 %v1015, %v1015
  %v1301 = vadd.f32 %v1299, %v1300
  %v1302 = vrot.slane %v1301, 4
  %v1303 = vadd.f32 %v1301, %v1302
  %v1304 = vrot.slane %v1303, 2
  %v1305 = vadd.f32 %v1303, %v1304
  %v1306 = vrot.slane %v1305, 1
  %v1307 = vadd.f32 %v1305, %v1306
  %v1308 = vmul.f32 %v1280, %v1280
  %v1309 = vmul.f32 %v1281, %v1281
  %v1310 = vadd.f32 %v1308, %v1309
  %v1311 = vrot.slane %v1310, 4
  %v1312 = vadd.f32 %v1310, %v1311
  %v1313 = vrot.slane %v1312, 2
  %v1314 = vadd.f32 %v1312, %v1313
  %v1315 = vrot.slane %v1314, 1
  %v1316 = vadd.f32 %v1314, %v1315
  %v1317 = vadd.f32 %v1307, %v1316
  %v1318 = vrcp.pop 32.0
  %v1319 = vmul.f32 %v1298, %v1318
  %v1320 = vmul.f32 %v1317, %v1318
  %v1321 = vmul.f32 %v1319, %v1319
  %v1322 = vsub.f32 %v1320, %v1321
  %v1323 = vmax.f32 %v1322, 0.0
  %v1324 = vadd.f32 %v1323, 1e-05
  %v1325 = vrsqrt.pop %v1324
  %v1326 = vmul.f32 %v1282, %v1325
  %v1327 = vmul.f32 %v1319, %v1326
  %v1328 = vsub.f32 %v1283, %v1327
  %v1330 = vlaneseq
  %v1331 = vshrl.u32 %v1330, 7
  %v1332 = vsub.s32 0, %v1331
  %v1333 = vrot.slane %v1326, %v1332
  %v1335 = vmul.f32 %v1014, %v1333
  %v1336 = vmul.f32 %v1015, %v1333
  %v1338 = vlaneseq
  %v1339 = vshrl.u32 %v1338, 7
  %v1340 = vsub.s32 0, %v1339
  %v1341 = vrot.slane %v1328, %v1340
  %v1343 = vadd.f32 %v1335, %v1341
  %v1344 = vadd.f32 %v1336, %v1341
  %v1345 = vmax.f32 %v1343, 0.0
  %v1346 = vmax.f32 %v1344, 0.0
  %v1347 = vmul.f32 %v1280, %v1333
  %v1348 = vmul.f32 %v1281, %v1333
  %v1349 = vadd.f32 %v1347, %v1341
  %v1350 = vadd.f32 %v1348, %v1341
  %v1351 = vmax.f32 %v1349, 0.0
  %v1352 = vmax.f32 %v1350, 0.0
  %v1353 = vpack.c.bf16 %v1345, %v1345
  %v1354 = vpack.c.bf16 %v1346, %v1346
  %v1355 = vpack.c.bf16 %v1351, %v1351
  %v1356 = vpack.c.bf16 %v1352, %v1352
  %v1357 = vrot.slane %v1345, 1
  %v1358 = vrot.slane %v1346, 1
  %v1359 = vmul.f32 %v1357, %v301
  %v1360 = vmul.f32 %v1358, %v301
  %v1361 = vpack.c.bf16 %v1359, %v1359
  %v1362 = vpack.c.bf16 %v1360, %v1360
  %v1363 = vrot.slane %v1351, 7
  %v1364 = vrot.slane %v1352, 7
  %v1365 = vmul.f32 %v1363, %v298
  %v1366 = vmul.f32 %v1364, %v298
  %v1367 = vpack.c.bf16 %v1365, %v1365
  %v1368 = vpack.c.bf16 %v1366, %v1366
  %v1369 = vld [vmem:[%s13] sm:$0xf]
  %v1370 = vld [vmem:[%s13 + $0x4] sm:$0xf]
  %v1371 = vld [vmem:[%s13 + $0x8] sm:$0xf]
  %v1372 = vld [vmem:[%s13 + $0xc] sm:$0xf]
  %v1373 = vld [vmem:[%s13 + $0x10] sm:$0xf]
  %v1374 = vld [vmem:[%s13 + $0x14] sm:$0xf]
  %v1375 = vld [vmem:[%s13 + $0x18] sm:$0xf]
  %v1376 = vld [vmem:[%s13 + $0x1c] sm:$0xf]
  %v1377 = vld [vmem:[%s13 + $0x20] sm:$0xf]
  %v1378 = vld [vmem:[%s13 + $0x24] sm:$0xf]
  %v1379 = vld [vmem:[%s13 + $0x28] sm:$0xf]
  %v1380 = vld [vmem:[%s13 + $0x2c] sm:$0xf]
  %v1381 = vld [vmem:[%s13 + $0x30] sm:$0xf]
  %v1382 = vld [vmem:[%s13 + $0x34] sm:$0xf]
  %v1383 = vld [vmem:[%s13 + $0x38] sm:$0xf]
  %v1384 = vld [vmem:[%s13 + $0x3c] sm:$0xf]
  %s1385 = scalar_lea.vmem %s13, 64
  %v1386 = vld [vmem:[%s1385] sm:$0xf]
  %v1387 = vld [vmem:[%s1385 + $0x4] sm:$0xf]
  %v1388 = vld [vmem:[%s1385 + $0x8] sm:$0xf]
  %v1389 = vld [vmem:[%s1385 + $0xc] sm:$0xf]
  %v1390 = vld [vmem:[%s1385 + $0x10] sm:$0xf]
  %v1391 = vld [vmem:[%s1385 + $0x14] sm:$0xf]
  %v1392 = vld [vmem:[%s1385 + $0x18] sm:$0xf]
  %v1393 = vld [vmem:[%s1385 + $0x1c] sm:$0xf]
  %v1394 = vld [vmem:[%s1385 + $0x20] sm:$0xf]
  %v1395 = vld [vmem:[%s1385 + $0x24] sm:$0xf]
  %v1396 = vld [vmem:[%s1385 + $0x28] sm:$0xf]
  %v1397 = vld [vmem:[%s1385 + $0x2c] sm:$0xf]
  %v1398 = vld [vmem:[%s1385 + $0x30] sm:$0xf]
  %v1399 = vld [vmem:[%s1385 + $0x34] sm:$0xf]
  %v1400 = vld [vmem:[%s1385 + $0x38] sm:$0xf]
  %v1401 = vld [vmem:[%s1385 + $0x3c] sm:$0xf]
  %v1404 = vunpack.c.l.b16 %v1353
  %v1405 = vunpack.c.l.b16 %v1354
  %v1406 = vpack.c.b16 %v1405, %v1404
  %v1424 = vunpack.c.l.b16 %v1386
  %v1425 = vunpack.c.l.b16 %v1387
  %v1426 = vunpack.c.l.b16 %v1388
  %v1427 = vunpack.c.l.b16 %v1389
  %v1428 = vunpack.c.l.b16 %v1390
  %v1429 = vunpack.c.l.b16 %v1391
  %v1430 = vunpack.c.l.b16 %v1392
  %v1431 = vunpack.c.l.b16 %v1393
  %v1432 = vunpack.c.l.b16 %v1394
  %v1433 = vunpack.c.l.b16 %v1395
  %v1434 = vunpack.c.l.b16 %v1396
  %v1435 = vunpack.c.l.b16 %v1397
  %v1436 = vunpack.c.l.b16 %v1398
  %v1437 = vunpack.c.l.b16 %v1399
  %v1438 = vunpack.c.l.b16 %v1400
  %v1439 = vunpack.c.l.b16 %v1401
  %v1440 = vpack.c.b16 %v1425, %v1424
  %v1441 = vpack.c.b16 %v1427, %v1426
  %v1442 = vpack.c.b16 %v1429, %v1428
  %v1443 = vpack.c.b16 %v1431, %v1430
  %v1444 = vpack.c.b16 %v1433, %v1432
  %v1445 = vpack.c.b16 %v1435, %v1434
  %v1446 = vpack.c.b16 %v1437, %v1436
  %v1447 = vpack.c.b16 %v1439, %v1438
  %1456 = vmatprep.subr.bf16.mxu0 0
  %1457 = vmatpush1.bf16.msra.mxu0 %v1440
  %1458 = vmatprep.subr.bf16.mxu0 0
  %1459 = vmatpush1.bf16.msra.mxu0 %v1441
  %1460 = vmatprep.subr.bf16.mxu0 0
  %1461 = vmatpush1.bf16.msra.mxu0 %v1442
  %1462 = vmatprep.subr.bf16.mxu0 0
  %1463 = vmatpush1.bf16.msra.mxu0 %v1443
  %1464 = vmatprep.subr.bf16.mxu0 0
  %1465 = vmatpush1.bf16.msra.mxu0 %v1444
  %1466 = vmatprep.subr.bf16.mxu0 0
  %1467 = vmatpush1.bf16.msra.mxu0 %v1445
  %1468 = vmatprep.subr.bf16.mxu0 0
  %1469 = vmatpush1.bf16.msra.mxu0 %v1446
  %1470 = vmatprep.subr.bf16.mxu0 0
  %1471 = vmatpush1.bf16.msra.mxu0 %v1447
  %1472 = vmatprep.subr.bf16.mxu0 0
  %1473 = vmatpush1.bf16.msra.mxu0 0
  %1474 = vmatprep.subr.bf16.mxu0 0
  %1475 = vmatpush1.bf16.msra.mxu0 0
  %1476 = vmatprep.subr.bf16.mxu0 0
  %1477 = vmatpush1.bf16.msra.mxu0 0
  %1478 = vmatprep.subr.bf16.mxu0 0
  %1479 = vmatpush1.bf16.msra.mxu0 0
  %1480 = vmatprep.subr.bf16.mxu0 0
  %1481 = vmatpush1.bf16.msra.mxu0 0
  %1482 = vmatprep.subr.bf16.mxu0 0
  %1483 = vmatpush1.bf16.msra.mxu0 0
  %1484 = vmatprep.subr.bf16.mxu0 0
  %1485 = vmatpush1.bf16.msra.mxu0 0
  %1486 = vmatprep.subr.bf16.mxu0 0
  %1487 = vmatpush1.bf16.msra.mxu0 0
  %1488 = vmatprep.mubr.bf16.mxu0 0
  %1489 = vmatmul.mubr.bf16.gmra.mrb[0].mxu0 %v1406
  %v1490 = vpop.f32.mrb[0].mxu0
  %v1491 = vadd.f32 0.0, %v1490
  %v1492 = vpop.f32.mrb[0].mxu0
  %v1493 = vpop.f32.mrb[0].mxu0
  %v1494 = vadd.f32 0.0, %v1493
  %v1495 = vpop.f32.mrb[0].mxu0
  %1496 = vdwg.mxu0
  %v1499 = vunpack.c.l.b16 %v1367
  %v1500 = vunpack.c.l.b16 %v1368
  %v1501 = vpack.c.b16 %v1500, %v1499
  %v1519 = vunpack.c.l.b16 %v1369
  %v1520 = vunpack.c.l.b16 %v1370
  %v1521 = vunpack.c.l.b16 %v1371
  %v1522 = vunpack.c.l.b16 %v1372
  %v1523 = vunpack.c.l.b16 %v1373
  %v1524 = vunpack.c.l.b16 %v1374
  %v1525 = vunpack.c.l.b16 %v1375
  %v1526 = vunpack.c.l.b16 %v1376
  %v1527 = vunpack.c.l.b16 %v1377
  %v1528 = vunpack.c.l.b16 %v1378
  %v1529 = vunpack.c.l.b16 %v1379
  %v1530 = vunpack.c.l.b16 %v1380
  %v1531 = vunpack.c.l.b16 %v1381
  %v1532 = vunpack.c.l.b16 %v1382
  %v1533 = vunpack.c.l.b16 %v1383
  %v1534 = vunpack.c.l.b16 %v1384
  %v1535 = vpack.c.b16 %v1520, %v1519
  %v1536 = vpack.c.b16 %v1522, %v1521
  %v1537 = vpack.c.b16 %v1524, %v1523
  %v1538 = vpack.c.b16 %v1526, %v1525
  %v1539 = vpack.c.b16 %v1528, %v1527
  %v1540 = vpack.c.b16 %v1530, %v1529
  %v1541 = vpack.c.b16 %v1532, %v1531
  %v1542 = vpack.c.b16 %v1534, %v1533
  %1551 = vmatprep.subr.bf16.mxu0 0
  %1552 = vmatpush1.bf16.msra.mxu0 %v1535
  %1553 = vmatprep.subr.bf16.mxu0 0
  %1554 = vmatpush1.bf16.msra.mxu0 %v1536
  %1555 = vmatprep.subr.bf16.mxu0 0
  %1556 = vmatpush1.bf16.msra.mxu0 %v1537
  %1557 = vmatprep.subr.bf16.mxu0 0
  %1558 = vmatpush1.bf16.msra.mxu0 %v1538
  %1559 = vmatprep.subr.bf16.mxu0 0
  %1560 = vmatpush1.bf16.msra.mxu0 %v1539
  %1561 = vmatprep.subr.bf16.mxu0 0
  %1562 = vmatpush1.bf16.msra.mxu0 %v1540
  %1563 = vmatprep.subr.bf16.mxu0 0
  %1564 = vmatpush1.bf16.msra.mxu0 %v1541
  %1565 = vmatprep.subr.bf16.mxu0 0
  %1566 = vmatpush1.bf16.msra.mxu0 %v1542
  %1567 = vmatprep.subr.bf16.mxu0 0
  %1568 = vmatpush1.bf16.msra.mxu0 0
  %1569 = vmatprep.subr.bf16.mxu0 0
  %1570 = vmatpush1.bf16.msra.mxu0 0
  %1571 = vmatprep.subr.bf16.mxu0 0
  %1572 = vmatpush1.bf16.msra.mxu0 0
  %1573 = vmatprep.subr.bf16.mxu0 0
  %1574 = vmatpush1.bf16.msra.mxu0 0
  %1575 = vmatprep.subr.bf16.mxu0 0
  %1576 = vmatpush1.bf16.msra.mxu0 0
  %1577 = vmatprep.subr.bf16.mxu0 0
  %1578 = vmatpush1.bf16.msra.mxu0 0
  %1579 = vmatprep.subr.bf16.mxu0 0
  %1580 = vmatpush1.bf16.msra.mxu0 0
  %1581 = vmatprep.subr.bf16.mxu0 0
  %1582 = vmatpush1.bf16.msra.mxu0 0
  %1583 = vmatprep.mubr.bf16.mxu0 0
  %1584 = vmatmul.mubr.bf16.gmra.mrb[0].mxu0 %v1501
  %v1585 = vpop.f32.mrb[0].mxu0
  %v1586 = vadd.f32 %v1491, %v1585
  %v1587 = vpop.f32.mrb[0].mxu0
  %v1588 = vpop.f32.mrb[0].mxu0
  %v1589 = vadd.f32 %v1494, %v1588
  %v1590 = vpop.f32.mrb[0].mxu0
  %1591 = vdwg.mxu0
  %s1592 = scalar_lea.vmem %s13, 128
  %v1593 = vld [vmem:[%s1592] sm:$0xf]
  %v1594 = vld [vmem:[%s1592 + $0x4] sm:$0xf]
  %v1595 = vld [vmem:[%s1592 + $0x8] sm:$0xf]
  %v1596 = vld [vmem:[%s1592 + $0xc] sm:$0xf]
  %v1597 = vld [vmem:[%s1592 + $0x10] sm:$0xf]
  %v1598 = vld [vmem:[%s1592 + $0x14] sm:$0xf]
  %v1599 = vld [vmem:[%s1592 + $0x18] sm:$0xf]
  %v1600 = vld [vmem:[%s1592 + $0x1c] sm:$0xf]
  %v1601 = vld [vmem:[%s1592 + $0x20] sm:$0xf]
  %v1602 = vld [vmem:[%s1592 + $0x24] sm:$0xf]
  %v1603 = vld [vmem:[%s1592 + $0x28] sm:$0xf]
  %v1604 = vld [vmem:[%s1592 + $0x2c] sm:$0xf]
  %v1605 = vld [vmem:[%s1592 + $0x30] sm:$0xf]
  %v1606 = vld [vmem:[%s1592 + $0x34] sm:$0xf]
  %v1607 = vld [vmem:[%s1592 + $0x38] sm:$0xf]
  %v1608 = vld [vmem:[%s1592 + $0x3c] sm:$0xf]
  %v1611 = vunpack.c.l.b16 %v1355
  %v1612 = vunpack.c.l.b16 %v1356
  %v1613 = vpack.c.b16 %v1612, %v1611
  %v1631 = vunpack.c.l.b16 %v1593
  %v1632 = vunpack.c.l.b16 %v1594
  %v1633 = vunpack.c.l.b16 %v1595
  %v1634 = vunpack.c.l.b16 %v1596
  %v1635 = vunpack.c.l.b16 %v1597
  %v1636 = vunpack.c.l.b16 %v1598
  %v1637 = vunpack.c.l.b16 %v1599
  %v1638 = vunpack.c.l.b16 %v1600
  %v1639 = vunpack.c.l.b16 %v1601
  %v1640 = vunpack.c.l.b16 %v1602
  %v1641 = vunpack.c.l.b16 %v1603
  %v1642 = vunpack.c.l.b16 %v1604
  %v1643 = vunpack.c.l.b16 %v1605
  %v1644 = vunpack.c.l.b16 %v1606
  %v1645 = vunpack.c.l.b16 %v1607
  %v1646 = vunpack.c.l.b16 %v1608
  %v1647 = vpack.c.b16 %v1632, %v1631
  %v1648 = vpack.c.b16 %v1634, %v1633
  %v1649 = vpack.c.b16 %v1636, %v1635
  %v1650 = vpack.c.b16 %v1638, %v1637
  %v1651 = vpack.c.b16 %v1640, %v1639
  %v1652 = vpack.c.b16 %v1642, %v1641
  %v1653 = vpack.c.b16 %v1644, %v1643
  %v1654 = vpack.c.b16 %v1646, %v1645
  %1663 = vmatprep.subr.bf16.mxu0 0
  %1664 = vmatpush1.bf16.msra.mxu0 %v1647
  %1665 = vmatprep.subr.bf16.mxu0 0
  %1666 = vmatpush1.bf16.msra.mxu0 %v1648
  %1667 = vmatprep.subr.bf16.mxu0 0
  %1668 = vmatpush1.bf16.msra.mxu0 %v1649
  %1669 = vmatprep.subr.bf16.mxu0 0
  %1670 = vmatpush1.bf16.msra.mxu0 %v1650
  %1671 = vmatprep.subr.bf16.mxu0 0
  %1672 = vmatpush1.bf16.msra.mxu0 %v1651
  %1673 = vmatprep.subr.bf16.mxu0 0
  %1674 = vmatpush1.bf16.msra.mxu0 %v1652
  %1675 = vmatprep.subr.bf16.mxu0 0
  %1676 = vmatpush1.bf16.msra.mxu0 %v1653
  %1677 = vmatprep.subr.bf16.mxu0 0
  %1678 = vmatpush1.bf16.msra.mxu0 %v1654
  %1679 = vmatprep.subr.bf16.mxu0 0
  %1680 = vmatpush1.bf16.msra.mxu0 0
  %1681 = vmatprep.subr.bf16.mxu0 0
  %1682 = vmatpush1.bf16.msra.mxu0 0
  %1683 = vmatprep.subr.bf16.mxu0 0
  %1684 = vmatpush1.bf16.msra.mxu0 0
  %1685 = vmatprep.subr.bf16.mxu0 0
  %1686 = vmatpush1.bf16.msra.mxu0 0
  %1687 = vmatprep.subr.bf16.mxu0 0
  %1688 = vmatpush1.bf16.msra.mxu0 0
  %1689 = vmatprep.subr.bf16.mxu0 0
  %1690 = vmatpush1.bf16.msra.mxu0 0
  %1691 = vmatprep.subr.bf16.mxu0 0
  %1692 = vmatpush1.bf16.msra.mxu0 0
  %1693 = vmatprep.subr.bf16.mxu0 0
  %1694 = vmatpush1.bf16.msra.mxu0 0
  %1695 = vmatprep.mubr.bf16.mxu0 0
  %1696 = vmatmul.mubr.bf16.gmra.mrb[0].mxu0 %v1613
  %v1697 = vpop.f32.mrb[0].mxu0
  %v1698 = vadd.f32 0.0, %v1697
  %v1699 = vpop.f32.mrb[0].mxu0
  %v1700 = vpop.f32.mrb[0].mxu0
  %v1701 = vadd.f32 0.0, %v1700
  %v1702 = vpop.f32.mrb[0].mxu0
  %1703 = vdwg.mxu0
  %v1704 = vadd.f32 %v1586, %v1698
  %v1705 = vadd.f32 %v1589, %v1701
  %1706 = vmatprep.subr.bf16.mxu0 0
  %1707 = vmatpush1.bf16.msra.mxu0 %v1440
  %1708 = vmatprep.subr.bf16.mxu0 0
  %1709 = vmatpush1.bf16.msra.mxu0 %v1441
  %1710 = vmatprep.subr.bf16.mxu0 0
  %1711 = vmatpush1.bf16.msra.mxu0 %v1442
  %1712 = vmatprep.subr.bf16.mxu0 0
  %1713 = vmatpush1.bf16.msra.mxu0 %v1443
  %1714 = vmatprep.subr.bf16.mxu0 0
  %1715 = vmatpush1.bf16.msra.mxu0 %v1444
  %1716 = vmatprep.subr.bf16.mxu0 0
  %1717 = vmatpush1.bf16.msra.mxu0 %v1445
  %1718 = vmatprep.subr.bf16.mxu0 0
  %1719 = vmatpush1.bf16.msra.mxu0 %v1446
  %1720 = vmatprep.subr.bf16.mxu0 0
  %1721 = vmatpush1.bf16.msra.mxu0 %v1447
  %1722 = vmatprep.subr.bf16.mxu0 0
  %1723 = vmatpush1.bf16.msra.mxu0 0
  %1724 = vmatprep.subr.bf16.mxu0 0
  %1725 = vmatpush1.bf16.msra.mxu0 0
  %1726 = vmatprep.subr.bf16.mxu0 0
  %1727 = vmatpush1.bf16.msra.mxu0 0
  %1728 = vmatprep.subr.bf16.mxu0 0
  %1729 = vmatpush1.bf16.msra.mxu0 0
  %1730 = vmatprep.subr.bf16.mxu0 0
  %1731 = vmatpush1.bf16.msra.mxu0 0
  %1732 = vmatprep.subr.bf16.mxu0 0
  %1733 = vmatpush1.bf16.msra.mxu0 0
  %1734 = vmatprep.subr.bf16.mxu0 0
  %1735 = vmatpush1.bf16.msra.mxu0 0
  %1736 = vmatprep.subr.bf16.mxu0 0
  %1737 = vmatpush1.bf16.msra.mxu0 0
  %1738 = vmatprep.mubr.bf16.mxu0 0
  %1739 = vmatmul.mubr.bf16.gmra.mrb[0].mxu0 %v1613
  %v1740 = vpop.f32.mrb[0].mxu0
  %v1741 = vadd.f32 0.0, %v1740
  %v1742 = vpop.f32.mrb[0].mxu0
  %v1743 = vpop.f32.mrb[0].mxu0
  %v1744 = vadd.f32 0.0, %v1743
  %v1745 = vpop.f32.mrb[0].mxu0
  %1746 = vdwg.mxu0
  %1747 = vmatprep.subr.bf16.mxu0 0
  %1748 = vmatpush1.bf16.msra.mxu0 %v1535
  %1749 = vmatprep.subr.bf16.mxu0 0
  %1750 = vmatpush1.bf16.msra.mxu0 %v1536
  %1751 = vmatprep.subr.bf16.mxu0 0
  %1752 = vmatpush1.bf16.msra.mxu0 %v1537
  %1753 = vmatprep.subr.bf16.mxu0 0
  %1754 = vmatpush1.bf16.msra.mxu0 %v1538
  %1755 = vmatprep.subr.bf16.mxu0 0
  %1756 = vmatpush1.bf16.msra.mxu0 %v1539
  %1757 = vmatprep.subr.bf16.mxu0 0
  %1758 = vmatpush1.bf16.msra.mxu0 %v1540
  %1759 = vmatprep.subr.bf16.mxu0 0
  %1760 = vmatpush1.bf16.msra.mxu0 %v1541
  %1761 = vmatprep.subr.bf16.mxu0 0
  %1762 = vmatpush1.bf16.msra.mxu0 %v1542
  %1763 = vmatprep.subr.bf16.mxu0 0
  %1764 = vmatpush1.bf16.msra.mxu0 0
  %1765 = vmatprep.subr.bf16.mxu0 0
  %1766 = vmatpush1.bf16.msra.mxu0 0
  %1767 = vmatprep.subr.bf16.mxu0 0
  %1768 = vmatpush1.bf16.msra.mxu0 0
  %1769 = vmatprep.subr.bf16.mxu0 0
  %1770 = vmatpush1.bf16.msra.mxu0 0
  %1771 = vmatprep.subr.bf16.mxu0 0
  %1772 = vmatpush1.bf16.msra.mxu0 0
  %1773 = vmatprep.subr.bf16.mxu0 0
  %1774 = vmatpush1.bf16.msra.mxu0 0
  %1775 = vmatprep.subr.bf16.mxu0 0
  %1776 = vmatpush1.bf16.msra.mxu0 0
  %1777 = vmatprep.subr.bf16.mxu0 0
  %1778 = vmatpush1.bf16.msra.mxu0 0
  %1779 = vmatprep.mubr.bf16.mxu0 0
  %1780 = vmatmul.mubr.bf16.gmra.mrb[0].mxu0 %v1406
  %v1781 = vpop.f32.mrb[0].mxu0
  %v1782 = vadd.f32 %v1741, %v1781
  %v1783 = vpop.f32.mrb[0].mxu0
  %v1784 = vpop.f32.mrb[0].mxu0
  %v1785 = vadd.f32 %v1744, %v1784
  %v1786 = vpop.f32.mrb[0].mxu0
  %1787 = vdwg.mxu0
  %v1790 = vunpack.c.l.b16 %v1361
  %v1791 = vunpack.c.l.b16 %v1362
  %v1792 = vpack.c.b16 %v1791, %v1790
  %1794 = vmatprep.subr.bf16.mxu0 0
  %1795 = vmatpush1.bf16.msra.mxu0 %v1647
  %1796 = vmatprep.subr.bf16.mxu0 0
  %1797 = vmatpush1.bf16.msra.mxu0 %v1648
  %1798 = vmatprep.subr.bf16.mxu0 0
  %1799 = vmatpush1.bf16.msra.mxu0 %v1649
  %1800 = vmatprep.subr.bf16.mxu0 0
  %1801 = vmatpush1.bf16.msra.mxu0 %v1650
  %1802 = vmatprep.subr.bf16.mxu0 0
  %1803 = vmatpush1.bf16.msra.mxu0 %v1651
  %1804 = vmatprep.subr.bf16.mxu0 0
  %1805 = vmatpush1.bf16.msra.mxu0 %v1652
  %1806 = vmatprep.subr.bf16.mxu0 0
  %1807 = vmatpush1.bf16.msra.mxu0 %v1653
  %1808 = vmatprep.subr.bf16.mxu0 0
  %1809 = vmatpush1.bf16.msra.mxu0 %v1654
  %1810 = vmatprep.subr.bf16.mxu0 0
  %1811 = vmatpush1.bf16.msra.mxu0 0
  %1812 = vmatprep.subr.bf16.mxu0 0
  %1813 = vmatpush1.bf16.msra.mxu0 0
  %1814 = vmatprep.subr.bf16.mxu0 0
  %1815 = vmatpush1.bf16.msra.mxu0 0
  %1816 = vmatprep.subr.bf16.mxu0 0
  %1817 = vmatpush1.bf16.msra.mxu0 0
  %1818 = vmatprep.subr.bf16.mxu0 0
  %1819 = vmatpush1.bf16.msra.mxu0 0
  %1820 = vmatprep.subr.bf16.mxu0 0
  %1821 = vmatpush1.bf16.msra.mxu0 0
  %1822 = vmatprep.subr.bf16.mxu0 0
  %1823 = vmatpush1.bf16.msra.mxu0 0
  %1824 = vmatprep.subr.bf16.mxu0 0
  %1825 = vmatpush1.bf16.msra.mxu0 0
  %1826 = vmatprep.mubr.bf16.mxu0 0
  %1827 = vmatmul.mubr.bf16.gmra.mrb[0].mxu0 %v1792
  %v1828 = vpop.f32.mrb[0].mxu0
  %v1829 = vadd.f32 0.0, %v1828
  %v1830 = vpop.f32.mrb[0].mxu0
  %v1831 = vpop.f32.mrb[0].mxu0
  %v1832 = vadd.f32 0.0, %v1831
  %v1833 = vpop.f32.mrb[0].mxu0
  %1834 = vdwg.mxu0
  %v1835 = vadd.f32 %v1782, %v1829
  %v1836 = vadd.f32 %v1785, %v1832
  %v1837 = vld [vmem:[%s14] sm:$0x1]
  %v1838 = vld [vmem:[%s15] sm:$0x1]
  %v1839 = vadd.f32 %v1704, %v1705
  %v1840 = vrot.slane %v1839, 4
  %v1841 = vadd.f32 %v1839, %v1840
  %v1842 = vrot.slane %v1841, 2
  %v1843 = vadd.f32 %v1841, %v1842
  %v1844 = vrot.slane %v1843, 1
  %v1845 = vadd.f32 %v1843, %v1844
  %v1846 = vadd.f32 %v1835, %v1836
  %v1847 = vrot.slane %v1846, 4
  %v1848 = vadd.f32 %v1846, %v1847
  %v1849 = vrot.slane %v1848, 2
  %v1850 = vadd.f32 %v1848, %v1849
  %v1851 = vrot.slane %v1850, 1
  %v1852 = vadd.f32 %v1850, %v1851
  %v1853 = vadd.f32 %v1845, %v1852
  %v1854 = vmul.f32 %v1704, %v1704
  %v1855 = vmul.f32 %v1705, %v1705
  %v1856 = vadd.f32 %v1854, %v1855
  %v1857 = vrot.slane %v1856, 4
  %v1858 = vadd.f32 %v1856, %v1857
  %v1859 = vrot.slane %v1858, 2
  %v1860 = vadd.f32 %v1858, %v1859
  %v1861 = vrot.slane %v1860, 1
  %v1862 = vadd.f32 %v1860, %v1861
  %v1863 = vmul.f32 %v1835, %v1835
  %v1864 = vmul.f32 %v1836, %v1836
  %v1865 = vadd.f32 %v1863, %v1864
  %v1866 = vrot.slane %v1865, 4
  %v1867 = vadd.f32 %v1865, %v1866
  %v1868 = vrot.slane %v1867, 2
  %v1869 = vadd.f32 %v1867, %v1868
  %v1870 = vrot.slane %v1869, 1
  %v1871 = vadd.f32 %v1869, %v1870
  %v1872 = vadd.f32 %v1862, %v1871
  %v1873 = vmul.f32 %v1853, %v1318
  %v1874 = vmul.f32 %v1872, %v1318
  %v1875 = vmul.f32 %v1873, %v1873
  %v1876 = vsub.f32 %v1874, %v1875
  %v1877 = vmax.f32 %v1876, 0.0
  %v1878 = vadd.f32 %v1877, 1e-05
  %v1879 = vrsqrt.pop %v1878
  %v1880 = vmul.f32 %v1837, %v1879
  %v1881 = vmul.f32 %v1873, %v1880
  %v1882 = vsub.f32 %v1838, %v1881
  %v1884 = vlaneseq
  %v1885 = vshrl.u32 %v1884, 7
  %v1886 = vsub.s32 0, %v1885
  %v1887 = vrot.slane %v1880, %v1886
  %v1889 = vmul.f32 %v1704, %v1887
  %v1890 = vmul.f32 %v1705, %v1887
  %v1892 = vlaneseq
  %v1893 = vshrl.u32 %v1892, 7
  %v1894 = vsub.s32 0, %v1893
  %v1895 = vrot.slane %v1882, %v1894
  %v1897 = vadd.f32 %v1889, %v1895
  %v1898 = vadd.f32 %v1890, %v1895
  %v1899 = vmax.f32 %v1897, 0.0
  %v1900 = vmax.f32 %v1898, 0.0
  %1901 = vst [vmem:[%s16] sm:$0xff] %v1899
  %1902 = vst [vmem:[%s16 + $0x10] sm:$0xff] %v1900
  %v1903 = vmul.f32 %v1835, %v1887
  %v1904 = vmul.f32 %v1836, %v1887
  %v1905 = vadd.f32 %v1903, %v1895
  %v1906 = vadd.f32 %v1904, %v1895
  %v1907 = vmax.f32 %v1905, 0.0
  %v1908 = vmax.f32 %v1906, 0.0
  %1909 = vst [vmem:[%s16 + $0x8] sm:$0xff] %v1907
  %1910 = vst [vmem:[%s16 + $0x18] sm:$0xff] %v1908
  // Predicated region
  $region66: #{upsample_block.1} parent=0 // pred_check
    _
  $region67: #{upsample_block.1} parent=0 // pred_check_branch
    %1912 = sbr.rel (0) target = $region69
  $region68: #{upsample_block.1} parent=0 // pred_region
    _
  $region69: #{upsample_block.1} parent=0 // pred_fallthru
    _
  // Predicated region
  $region70: #{upsample_block.1} parent=0 // pred_check
    _
  $region71: #{upsample_block.1} parent=0 // pred_check_branch
    %1914 = sbr.rel (0) target = $region73
  $region72: #{upsample_block.1} parent=0 // pred_region
    _
  $region73: #{upsample_block.1} parent=0 // pred_fallthru
    _

</llo_original>
